<compile_context>
chip_gen: v5e
topology: v5e:2x2
jax: 0.10.0
libtpu: 0.0.40
codegen_flags: <defaults>
</compile_context>

<pallas_src>
import functools

import numpy as np

import jax
import jax.numpy as jnp
from jax.experimental import pallas as pl
from jax.experimental.pallas import tpu as pltpu


# -----------------------------------------------------------------------------
# Small constant matrices (built in numpy at trace time)
# -----------------------------------------------------------------------------
def _round_up(x, m):
    return (x + m - 1) // m * m


def _pick_wp(h, w):
    """Smallest padded width >= w+2 with h*Wp a multiple of 128 (lane-dense)."""
    for cand in range(w + 2, w + 2 + 129):
        if (h * cand) % 128 == 0:
            return cand
    return w + 2      # fallback: correct but not lane-dense


def _interp_matrix_np(out_size, in_size):
    """PyTorch bilinear (align_corners=False) 1-D interpolation matrix."""
    i = np.arange(out_size, dtype=np.float64)
    src = np.maximum((i + 0.5) * (in_size / out_size) - 0.5, 0.0)
    i0 = np.minimum(np.floor(src).astype(np.int64), in_size - 1)
    i1 = np.minimum(i0 + 1, in_size - 1)
    frac = np.clip(src - i0, 0.0, 1.0)
    m = np.zeros((out_size, in_size), np.float32)
    rows = np.arange(out_size)
    m[rows, i0] += (1.0 - frac).astype(np.float32)
    m[rows, i1] += frac.astype(np.float32)
    return m


def _resize_place_matrix_np(h_in, w_in, wp_in, h_out, w_out, wp_out, lanes_out):
    """(h_in*wp_in, lanes_out) matrix: right-multiplying a conv result laid out
    as (Cout, h_in*wp_in) bilinearly resizes its valid (h_in, w_in) pixels to
    (h_out, w_out) and scatters them into the next conv's zero-padded slab
    layout ((h_out+3, wp_out) row-major, data at rows 1..h_out, cols 1..w_out).
    Wrap / halo positions are all-zero rows / columns -> no extra masking."""
    rh = _interp_matrix_np(h_out, h_in)                  # (h_out, h_in)
    rw = _interp_matrix_np(w_out, w_in)                  # (w_out, w_in)
    k = np.einsum('oi,pj->opij', rh, rw).astype(np.float32)
    kfull = np.zeros((h_out, w_out, h_in, wp_in), np.float32)
    kfull[:, :, :, :w_in] = k
    kfull = kfull.reshape(h_out * w_out, h_in * wp_in)
    dst = ((np.arange(h_out)[:, None] + 1) * wp_out
           + (np.arange(w_out)[None, :] + 1)).reshape(-1)
    m = np.zeros((h_in * wp_in, lanes_out), np.float32)
    m[:, dst] = kfull.T
    return m


def nchw_to_slab(x, wp, lanes):
    """Leaf-input helper: zero-pad NCHW to the (H+3, Wp) halo layout, flatten
    spatial, pad the lane dim to `lanes`, cast bf16.  Chained convs emit this
    layout directly from their Pallas epilogue (no glue between kernels)."""
    n, c, h, w = x.shape
    xp = jnp.pad(x, ((0, 0), (0, 0), (1, 2), (1, wp - w - 1)))
    xp = xp.reshape(n, c, (h + 3) * wp)
    if lanes > (h + 3) * wp:
        xp = jnp.pad(xp, ((0, 0), (0, 0), (0, lanes - (h + 3) * wp)))
    return xp.astype(jnp.bfloat16)


def bilinear_resize_nchw(x, out_h, out_w):
    """align_corners=False bilinear resize via two tiny interp matmuls."""
    rh = jnp.asarray(_interp_matrix_np(out_h, x.shape[2]))
    rw = jnp.asarray(_interp_matrix_np(out_w, x.shape[3]))
    t = jnp.einsum('nchw,ow->ncho', x, rw)
    return jnp.einsum('ncho,ph->ncpo', t, rh)


# -----------------------------------------------------------------------------
# Fused conv3x3 (+bias [+GroupNorm] [+ReLU] [+SE] [+resize/place]) kernel
# -----------------------------------------------------------------------------
def _conv_fused_kernel(*refs, cins, H, W, Wp, apply_gn, apply_relu, apply_se,
                       has_place, eps=1e-5):
    # refs: x_0..x_{n-1}, w, bias, [mask], [gamma, beta, gmat],
    #       [se_w, se_b], [place_mat], out, stk_scratch
    # x_i:   (1, Cin_i, Lp_i) bf16 zero-padded flattened slab
    # w:     (Cout, sum_i 9*Cin_i) bf16 (column order: input, kh, kw, cin)
    # bias/gamma/beta/se_b: (Cout, 1) f32 ; gmat/se_w: (Cout, Cout) f32
    # mask:  (1, H*Wp) f32, zero on the wrap columns
    # place_mat: (H*Wp, Lp_next) bf16 (resize + placement into next slab)
    # out:   (1, Cout, Lp_next) bf16   or (1, Cout, H*Wp) f32
    n_in = len(cins)
    HWv = H * Wp

    x_refs = refs[:n_in]
    pos = n_in
    w_ref = refs[pos]; pos += 1
    b_ref = refs[pos]; pos += 1
    mask_ref = gamma_ref = beta_ref = gmat_ref = sew_ref = seb_ref = None
    p_ref = None
    if apply_gn or apply_se:
        mask_ref = refs[pos]; pos += 1
    if apply_gn:
        gamma_ref, beta_ref, gmat_ref = refs[pos:pos + 3]; pos += 3
    if apply_se:
        sew_ref, seb_ref = refs[pos:pos + 2]; pos += 2
    if has_place:
        p_ref = refs[pos]; pos += 1
    o_ref = refs[pos]; pos += 1
    stk_ref = refs[pos]

    # Build the stacked (Ktot, HWv) bf16 operand: 9 statically lane-shifted
    # windows of each resident padded slab ("padded-width" trick; no im2col).
    row = 0
    for i in range(n_in):
        xv = x_refs[i][0]                              # (Cin_i, Lp_i) bf16
        for kh in range(3):
            for kw in range(3):
                start = kh * Wp + kw                   # static lane offset
                stk_ref[row:row + cins[i], :] = xv[:, start:start + HWv]
                row += cins[i]

    # Single big-K MXU dot (K = sum_i 9*Cin_i = 144..288).
    acc = jnp.dot(w_ref[...], stk_ref[...], preferred_element_type=jnp.float32)
    acc = acc + b_ref[...]                             # (Cout,1) over lanes

    if apply_gn or apply_se:
        mask = mask_ref[...]                           # (1, HWv)
        inv_n = 1.0 / float(H * W)

    if apply_gn:
        # Single-pass masked stats (sum, sum of squares); one tiny dot combines
        # channel stats into group stats (groups of consecutive channels).
        am = acc * mask
        ch_sum = jnp.sum(am, axis=1, keepdims=True)             # (Cout, 1)
        ch_ssq = jnp.sum(am * am, axis=1, keepdims=True)        # (Cout, 1)
        stats = jnp.concatenate([ch_sum, ch_ssq], axis=1)       # (Cout, 2)
        gstats = jnp.dot(gmat_ref[...], stats,
                         preferred_element_type=jnp.float32) * inv_n
        gmean = gstats[:, 0:1]
        gvar = gstats[:, 1:2] - gmean * gmean
        acc = (acc - gmean) * jax.lax.rsqrt(gvar + eps)
        acc = acc * gamma_ref[...] + beta_ref[...]

    if apply_relu:
        acc = jnp.maximum(acc, 0.0)

    if apply_se:
        # SE fused: masked global-avg-pool -> 1x1 conv -> sigmoid -> scale.
        m = jnp.sum(acc * mask, axis=1, keepdims=True) * inv_n   # (Cout, 1)
        z = jnp.dot(sew_ref[...], m,
                    preferred_element_type=jnp.float32) + seb_ref[...]
        acc = acc * jax.nn.sigmoid(z)

    if has_place:
        # Fused (resize+)placement: emits the NEXT conv's zero-padded bf16
        # slab directly (wrap columns are zero rows of P -> no extra mask).
        out = jnp.dot(acc.astype(jnp.bfloat16), p_ref[...],
                      preferred_element_type=jnp.float32)
        o_ref[0] = out.astype(o_ref.dtype)
    else:
        o_ref[0] = acc.astype(o_ref.dtype)


# -----------------------------------------------------------------------------
# Wrapper: conv over a (virtual) channel-concat of pre-built padded slabs
# -----------------------------------------------------------------------------
def conv3x3_fused(slabs, ws_list, b, *, H, W, Wp,
                  gamma=None, beta=None, num_groups=None,
                  se_w=None, se_b=None,
                  apply_gn=False, apply_relu=False, apply_se=False,
                  place_mat=None):
    """slabs: list of (N, Cin_i, Lp_i) bf16 padded slabs sharing (H, W, Wp);
    ws_list: matching list of (Cout, Cin_i, 3, 3) weights."""
    N = slabs[0].shape[0]
    Cout = ws_list[0].shape[0]
    cins = tuple(w.shape[1] for w in ws_list)
    for s, cin in zip(slabs, cins):
        assert s.shape[0] == N and s.shape[1] == cin
    HWv = H * Wp

    # (Cout, sum_i 9*Cin_i) bf16 weight; column order = (input, kh, kw, cin).
    wcat = jnp.concatenate(
        [jnp.transpose(w, (0, 2, 3, 1)).reshape(Cout, 9 * w.shape[1])
         for w in ws_list], axis=1).astype(jnp.bfloat16)
    Ktot = int(wcat.shape[1])

    args = list(slabs) + [wcat, b.reshape(Cout, 1).astype(jnp.float32)]
    in_specs = [pl.BlockSpec((1, s.shape[1], s.shape[2]), lambda n: (n, 0, 0))
                for s in slabs]
    in_specs += [pl.BlockSpec((Cout, Ktot), lambda n: (0, 0)),
                 pl.BlockSpec((Cout, 1), lambda n: (0, 0))]

    if apply_gn or apply_se:
        colmask = np.zeros((H, Wp), np.float32)
        colmask[:, :W] = 1.0
        args.append(jnp.asarray(colmask.reshape(1, HWv)))
        in_specs.append(pl.BlockSpec((1, HWv), lambda n: (0, 0)))

    if apply_gn:
        cpg = Cout // num_groups
        gids = np.arange(Cout) // cpg
        gmat = (gids[:, None] == gids[None, :]).astype(np.float32) / cpg
        args += [gamma.reshape(Cout, 1).astype(jnp.float32),
                 beta.reshape(Cout, 1).astype(jnp.float32),
                 jnp.asarray(gmat)]
        in_specs += [pl.BlockSpec((Cout, 1), lambda n: (0, 0)),
                     pl.BlockSpec((Cout, 1), lambda n: (0, 0)),
                     pl.BlockSpec((Cout, Cout), lambda n: (0, 0))]

    if apply_se:
        args += [se_w.reshape(Cout, Cout).astype(jnp.float32),
                 se_b.reshape(Cout, 1).astype(jnp.float32)]
        in_specs += [pl.BlockSpec((Cout, Cout), lambda n: (0, 0)),
                     pl.BlockSpec((Cout, 1), lambda n: (0, 0))]

    has_place = place_mat is not None
    if has_place:
        out_lanes = int(place_mat.shape[1])
        out_dtype = jnp.bfloat16                  # chained slab output
        args.append(jnp.asarray(place_mat, dtype=jnp.bfloat16))
        in_specs.append(pl.BlockSpec((HWv, out_lanes), lambda n: (0, 0)))
    else:
        out_lanes = HWv                           # lane-dense f32 output
        out_dtype = jnp.float32

    kernel = functools.partial(
        _conv_fused_kernel, cins=cins, H=H, W=W, Wp=Wp,
        apply_gn=apply_gn, apply_relu=apply_relu, apply_se=apply_se,
        has_place=has_place)

    return pl.pallas_call(
        kernel,
        out_shape=jax.ShapeDtypeStruct((N, Cout, out_lanes), out_dtype),
        grid=(N,),
        in_specs=in_specs,
        out_specs=pl.BlockSpec((1, Cout, out_lanes), lambda n: (n, 0, 0)),
        scratch_shapes=[pltpu.VMEM((Ktot, HWv), jnp.bfloat16)],
        compiler_params=pltpu.CompilerParams(
            dimension_semantics=("parallel",)),
    )(*args)


# -----------------------------------------------------------------------------
# region_block forward (all NCHW; chained kernels exchange bf16 padded slabs)
# -----------------------------------------------------------------------------
def region_block_forward(xs, glob_x, params, feat):
    f0, f2, f3 = feat[0], feat[2], feat[3]
    N, _, H3, W3 = xs[3].shape          # e.g. 8x8
    _, _, H2, W2 = xs[2].shape          # e.g. 16x16 (= 2x)

    wp4 = _pick_wp(H3, W3)                       # 16  -> 128 lanes
    wp3 = _pick_wp(H2, W2)                       # 24  -> 384 lanes
    lanes4 = _round_up((H3 + 3) * wp4, 128)      # 256
    lanes3 = _round_up((H2 + 3) * wp3, 128)      # 512

    # conv4: Conv3x3 -> GN -> ReLU, with the 2x bilinear upsample and the
    # emission of conv3's padded bf16 input slab fused into the epilogue.
    x3_slab = nchw_to_slab(xs[3], wp4, lanes4)
    p4 = _resize_place_matrix_np(H3, W3, wp4, H2, W2, wp3, lanes3)
    y_slab = conv3x3_fused(
        [x3_slab], [params["conv4_w"]], params["conv4_b"],
        H=H3, W=W3, Wp=wp4,
        gamma=params["conv4_gamma"], beta=params["conv4_beta"],
        num_groups=f2 // 2, apply_gn=True, apply_relu=True, place_mat=p4)

    # conv3 on the (virtual) concat [xs[2], reg_x]: GN + ReLU + SE fused;
    # epilogue emits the fuse conv's padded bf16 input slab.
    x2_slab = nchw_to_slab(xs[2], wp3, lanes3)
    p3 = _resize_place_matrix_np(H2, W2, wp3, H2, W2, wp3, lanes3)
    w3 = params["conv3_w"]
    y_slab = conv3x3_fused(
        [x2_slab, y_slab], [w3[:, :f2], w3[:, f2:]], params["conv3_b"],
        H=H2, W=W2, Wp=wp3,
        gamma=params["conv3_gamma"], beta=params["conv3_beta"],
        num_groups=f0 // 2, apply_gn=True, apply_relu=True,
        se_w=params["se_w"], se_b=params["se_b"], apply_se=True,
        place_mat=p3)

    # glob_x: bilinear resize + slab prep in plain JAX (tiny leaf input).
    # TODO(synk): fold this resize into the fuse kernel as well.
    g = bilinear_resize_nchw(glob_x, H2, W2)
    g_slab = nchw_to_slab(g, wp3, lanes3)

    # fuse conv on the (virtual) concat [reg_x, glob]: conv + bias only,
    # lane-dense f32 output; wrap columns sliced off below.
    wf = params["fuse_w"]
    out = conv3x3_fused(
        [y_slab, g_slab], [wf[:, :f0], wf[:, f0:]], params["fuse_b"],
        H=H2, W=W2, Wp=wp3)
    return out.reshape(N, f0, H2, wp3)[:, :, :, :W2]


# -----------------------------------------------------------------------------
# Pure-JAX f32 reference (mirrors the PyTorch module) for a parity check
# -----------------------------------------------------------------------------
def _conv3x3_ref(x, w, b):
    out = jax.lax.conv_general_dilated(
        x, w, window_strides=(1, 1), padding=((1, 1), (1, 1)),
        dimension_numbers=('NCHW', 'OIHW', 'NCHW'))
    return out + b.reshape(1, -1, 1, 1)


def _gn_ref(x, gamma, beta, num_groups, eps=1e-5):
    n, c, h, w = x.shape
    xg = x.reshape(n, num_groups, c // num_groups, h, w)
    mean = xg.mean(axis=(2, 3, 4), keepdims=True)
    var = ((xg - mean) ** 2).mean(axis=(2, 3, 4), keepdims=True)
    xg = (xg - mean) * jax.lax.rsqrt(var + eps)
    x = xg.reshape(n, c, h, w)
    return x * gamma.reshape(1, -1, 1, 1) + beta.reshape(1, -1, 1, 1)


def region_block_reference(xs, glob_x, params, feat):
    f0, f2, f3 = feat[0], feat[2], feat[3]
    y = _conv3x3_ref(xs[3], params["conv4_w"], params["conv4_b"])
    y = _gn_ref(y, params["conv4_gamma"], params["conv4_beta"], f2 // 2)
    y = jax.nn.relu(y)
    y = bilinear_resize_nchw(y, 2 * y.shape[2], 2 * y.shape[3])
    y = _conv3x3_ref(jnp.concatenate([xs[2], y], axis=1),
                     params["conv3_w"], params["conv3_b"])
    y = _gn_ref(y, params["conv3_gamma"], params["conv3_beta"], f0 // 2)
    y = jax.nn.relu(y)
    m = y.mean(axis=(2, 3), keepdims=True)
    z = jnp.einsum('oc,ncij->noij', params["se_w"][:, :, 0, 0], m)
    z = z + params["se_b"].reshape(1, -1, 1, 1)
    y = y * jax.nn.sigmoid(z)
    g = bilinear_resize_nchw(glob_x, y.shape[2], y.shape[3])
    y = _conv3x3_ref(jnp.concatenate([y, g], axis=1),
                     params["fuse_w"], params["fuse_b"])
    return y


# -----------------------------------------------------------------------------
# Params + demo
# -----------------------------------------------------------------------------
def init_params(key, feat):
    ks = jax.random.split(key, 10)
    f0, f2, f3 = feat[0], feat[2], feat[3]

    def w_init(k, shape):
        return jax.random.normal(k, shape, jnp.float32) * 0.05

    return {
        "conv4_w": w_init(ks[0], (f2, f3, 3, 3)),
        "conv4_b": w_init(ks[1], (f2,)),
        "conv4_gamma": jnp.ones((f2,), jnp.float32)
                       + 0.1 * jax.random.normal(ks[2], (f2,), jnp.float32),
        "conv4_beta": 0.1 * jax.random.normal(ks[3], (f2,), jnp.float32),
        "conv3_w": w_init(ks[4], (f0, f2 * 2, 3, 3)),
        "conv3_b": w_init(ks[5], (f0,)),
        "conv3_gamma": jnp.ones((f0,), jnp.float32)
                       + 0.1 * jax.random.normal(ks[6], (f0,), jnp.float32),
        "conv3_beta": 0.1 * jax.random.normal(ks[7], (f0,), jnp.float32),
        "se_w": w_init(ks[8], (f0, f0, 1, 1)),
        "se_b": jnp.zeros((f0,), jnp.float32),
        "fuse_w": w_init(ks[9], (f0, f0 * 2, 3, 3)),
        "fuse_b": jnp.zeros((f0,), jnp.float32),
    }


if __name__ == "__main__":
    feat = (8, 16, 16, 32)   # feat[0]=8, feat[2]=16, feat[3]=32 (feat[1] unused)
    N = 2
    H3 = W3 = 8              # xs[3] spatial
    H2 = W2 = 16             # xs[2] spatial (= 2 * xs[3] spatial)
    Hg = Wg = 4              # glob_x spatial

    key = jax.random.PRNGKey(0)
    k_x3, k_x2, k_x1, k_x0, k_g, k_p = jax.random.split(key, 6)

    xs = [
        jax.random.normal(k_x0, (N, feat[0], 32, 32), jnp.float32),  # unused
        jax.random.normal(k_x1, (N, feat[1], 32, 32), jnp.float32),  # unused
        jax.random.normal(k_x2, (N, feat[2], H2, W2), jnp.float32),
        jax.random.normal(k_x3, (N, feat[3], H3, W3), jnp.float32),
    ]
    glob_x = jax.random.normal(k_g, (N, feat[0], Hg, Wg), jnp.float32)
    params = init_params(k_p, feat)

    out = region_block_forward(xs, glob_x, params, feat)
    out = jax.block_until_ready(out)

    assert out.shape == (N, feat[0], H2, W2), out.shape
    assert bool(jnp.all(jnp.isfinite(out)))

    # Loose parity check vs a pure-JAX f32 reference (kernel matmuls are bf16).
    ref = region_block_reference(xs, glob_x, params, feat)
    err = float(jnp.max(jnp.abs(out - ref)))
    assert err < 0.15, f"max abs err vs reference: {err}"

    print("KERNEL_OK")
</pallas_src>

<mosaic_0001>
module attributes {stable_mosaic.version = 11 : i64} {
  func.func @_conv_fused_kernel(%arg0: i32, %arg1: memref<1x32x256xbf16, #tpu.memory_space<vmem>>, %arg2: memref<16x288xbf16, #tpu.memory_space<vmem>>, %arg3: memref<16x1xf32, #tpu.memory_space<vmem>>, %arg4: memref<1x128xf32, #tpu.memory_space<vmem>>, %arg5: memref<16x1xf32, #tpu.memory_space<vmem>>, %arg6: memref<16x1xf32, #tpu.memory_space<vmem>>, %arg7: memref<16x16xf32, #tpu.memory_space<vmem>>, %arg8: memref<128x512xbf16, #tpu.memory_space<vmem>>, %arg9: memref<1x16x512xbf16, #tpu.memory_space<vmem>>, %arg10: memref<288x128xbf16, #tpu.memory_space<vmem>>) attributes {dimension_semantics = [#tpu.dimension_semantics<parallel>], iteration_bounds = array<i64: 2>, scalar_prefetch = 0 : i64, scratch_operands = 1 : i64, tpu.core_type = #tpu.core_type<tc>, window_params = [{transform_indices = @transform_0, window_bounds = array<i64: 1, 32, 256>}, {pipeline_mode = #tpu.pipeline_mode<synchronous>, transform_indices = @transform_1, window_bounds = array<i64: 16, 288>}, {pipeline_mode = #tpu.pipeline_mode<synchronous>, transform_indices = @transform_2, window_bounds = array<i64: 16, 1>}, {pipeline_mode = #tpu.pipeline_mode<synchronous>, transform_indices = @transform_3, window_bounds = array<i64: 1, 128>}, {pipeline_mode = #tpu.pipeline_mode<synchronous>, transform_indices = @transform_4, window_bounds = array<i64: 16, 1>}, {pipeline_mode = #tpu.pipeline_mode<synchronous>, transform_indices = @transform_5, window_bounds = array<i64: 16, 1>}, {pipeline_mode = #tpu.pipeline_mode<synchronous>, transform_indices = @transform_6, window_bounds = array<i64: 16, 16>}, {pipeline_mode = #tpu.pipeline_mode<synchronous>, transform_indices = @transform_7, window_bounds = array<i64: 128, 512>}, {transform_indices = @transform_8, window_bounds = array<i64: 1, 16, 512>}]} {
    %c0 = arith.constant 0 : index
    %c0_0 = arith.constant 0 : index
    %c0_1 = arith.constant 0 : index
    %0 = vector.load %arg1[%c0, %c0_0, %c0_1] : memref<1x32x256xbf16, #tpu.memory_space<vmem>>, vector<1x32x256xbf16>
    %1 = vector.shape_cast %0 : vector<1x32x256xbf16> to vector<32x256xbf16>
    %2 = vector.extract_strided_slice %1 {offsets = [0, 0], sizes = [32, 128], strides = [1, 1]} : vector<32x256xbf16> to vector<32x128xbf16>
    %c0_2 = arith.constant 0 : index
    %c0_3 = arith.constant 0 : index
    %3 = vector.load %arg10[%c0_2, %c0_3] : memref<288x128xbf16, #tpu.memory_space<vmem>>, vector<32x128xbf16>
    tpu.vector_store %arg10[%c0_2, %c0_3], %2 {strides = array<i32>} : memref<288x128xbf16, #tpu.memory_space<vmem>>, vector<32x128xbf16>,
    %4 = vector.extract_strided_slice %1 {offsets = [0, 1], sizes = [32, 128], strides = [1, 1]} : vector<32x256xbf16> to vector<32x128xbf16>
    %c32 = arith.constant 32 : index
    %c0_4 = arith.constant 0 : index
    %5 = vector.load %arg10[%c32, %c0_4] : memref<288x128xbf16, #tpu.memory_space<vmem>>, vector<32x128xbf16>
    tpu.vector_store %arg10[%c32, %c0_4], %4 {strides = array<i32>} : memref<288x128xbf16, #tpu.memory_space<vmem>>, vector<32x128xbf16>,
    %6 = vector.extract_strided_slice %1 {offsets = [0, 2], sizes = [32, 128], strides = [1, 1]} : vector<32x256xbf16> to vector<32x128xbf16>
    %c64 = arith.constant 64 : index
    %c0_5 = arith.constant 0 : index
    %7 = vector.load %arg10[%c64, %c0_5] : memref<288x128xbf16, #tpu.memory_space<vmem>>, vector<32x128xbf16>
    tpu.vector_store %arg10[%c64, %c0_5], %6 {strides = array<i32>} : memref<288x128xbf16, #tpu.memory_space<vmem>>, vector<32x128xbf16>,
    %8 = vector.extract_strided_slice %1 {offsets = [0, 16], sizes = [32, 128], strides = [1, 1]} : vector<32x256xbf16> to vector<32x128xbf16>
    %c96 = arith.constant 96 : index
    %c0_6 = arith.constant 0 : index
    %9 = vector.load %arg10[%c96, %c0_6] : memref<288x128xbf16, #tpu.memory_space<vmem>>, vector<32x128xbf16>
    tpu.vector_store %arg10[%c96, %c0_6], %8 {strides = array<i32>} : memref<288x128xbf16, #tpu.memory_space<vmem>>, vector<32x128xbf16>,
    %10 = vector.extract_strided_slice %1 {offsets = [0, 17], sizes = [32, 128], strides = [1, 1]} : vector<32x256xbf16> to vector<32x128xbf16>
    %c128 = arith.constant 128 : index
    %c0_7 = arith.constant 0 : index
    %11 = vector.load %arg10[%c128, %c0_7] : memref<288x128xbf16, #tpu.memory_space<vmem>>, vector<32x128xbf16>
    tpu.vector_store %arg10[%c128, %c0_7], %10 {strides = array<i32>} : memref<288x128xbf16, #tpu.memory_space<vmem>>, vector<32x128xbf16>,
    %12 = vector.extract_strided_slice %1 {offsets = [0, 18], sizes = [32, 128], strides = [1, 1]} : vector<32x256xbf16> to vector<32x128xbf16>
    %c160 = arith.constant 160 : index
    %c0_8 = arith.constant 0 : index
    %13 = vector.load %arg10[%c160, %c0_8] : memref<288x128xbf16, #tpu.memory_space<vmem>>, vector<32x128xbf16>
    tpu.vector_store %arg10[%c160, %c0_8], %12 {strides = array<i32>} : memref<288x128xbf16, #tpu.memory_space<vmem>>, vector<32x128xbf16>,
    %14 = vector.extract_strided_slice %1 {offsets = [0, 32], sizes = [32, 128], strides = [1, 1]} : vector<32x256xbf16> to vector<32x128xbf16>
    %c192 = arith.constant 192 : index
    %c0_9 = arith.constant 0 : index
    %15 = vector.load %arg10[%c192, %c0_9] : memref<288x128xbf16, #tpu.memory_space<vmem>>, vector<32x128xbf16>
    tpu.vector_store %arg10[%c192, %c0_9], %14 {strides = array<i32>} : memref<288x128xbf16, #tpu.memory_space<vmem>>, vector<32x128xbf16>,
    %16 = vector.extract_strided_slice %1 {offsets = [0, 33], sizes = [32, 128], strides = [1, 1]} : vector<32x256xbf16> to vector<32x128xbf16>
    %c224 = arith.constant 224 : index
    %c0_10 = arith.constant 0 : index
    %17 = vector.load %arg10[%c224, %c0_10] : memref<288x128xbf16, #tpu.memory_space<vmem>>, vector<32x128xbf16>
    tpu.vector_store %arg10[%c224, %c0_10], %16 {strides = array<i32>} : memref<288x128xbf16, #tpu.memory_space<vmem>>, vector<32x128xbf16>,
    %18 = vector.extract_strided_slice %1 {offsets = [0, 34], sizes = [32, 128], strides = [1, 1]} : vector<32x256xbf16> to vector<32x128xbf16>
    %c256 = arith.constant 256 : index
    %c0_11 = arith.constant 0 : index
    %19 = vector.load %arg10[%c256, %c0_11] : memref<288x128xbf16, #tpu.memory_space<vmem>>, vector<32x128xbf16>
    tpu.vector_store %arg10[%c256, %c0_11], %18 {strides = array<i32>} : memref<288x128xbf16, #tpu.memory_space<vmem>>, vector<32x128xbf16>,
    %c0_12 = arith.constant 0 : index
    %c0_13 = arith.constant 0 : index
    %20 = vector.load %arg2[%c0_12, %c0_13] : memref<16x288xbf16, #tpu.memory_space<vmem>>, vector<16x288xbf16>
    %c0_14 = arith.constant 0 : index
    %c0_15 = arith.constant 0 : index
    %21 = vector.load %arg10[%c0_14, %c0_15] : memref<288x128xbf16, #tpu.memory_space<vmem>>, vector<288x128xbf16>
    %cst = arith.constant dense<0.000000e+00> : vector<16x128xf32>
    %22 = tpu.matmul %20, %21, %cst {dimension_numbers = #tpu.dot_dimension_numbers<[1], [0], [0], [1], [0, 0, 1, 1], [], []>} : vector<16x288xbf16>, vector<288x128xbf16>, vector<16x128xf32> -> vector<16x128xf32>
    %c0_16 = arith.constant 0 : index
    %c0_17 = arith.constant 0 : index
    %23 = vector.load %arg3[%c0_16, %c0_17] : memref<16x1xf32, #tpu.memory_space<vmem>>, vector<16x1xf32>
    %24 = vector.broadcast %23 : vector<16x1xf32> to vector<16x128xf32>
    %25 = arith.addf %22, %24 : vector<16x128xf32>
    %c0_18 = arith.constant 0 : index
    %c0_19 = arith.constant 0 : index
    %26 = vector.load %arg4[%c0_18, %c0_19] : memref<1x128xf32, #tpu.memory_space<vmem>>, vector<1x128xf32>
    %27 = vector.broadcast %26 : vector<1x128xf32> to vector<16x128xf32>
    %28 = arith.mulf %25, %27 : vector<16x128xf32>
    %cst_20 = arith.constant dense<0.000000e+00> : vector<16xf32>
    %29 = vector.multi_reduction <add>, %28, %cst_20 [1] : vector<16x128xf32> to vector<16xf32>
    %30 = vector.shape_cast %29 : vector<16xf32> to vector<16x1xf32>
    %31 = arith.mulf %28, %28 : vector<16x128xf32>
    %cst_21 = arith.constant dense<0.000000e+00> : vector<16xf32>
    %32 = vector.multi_reduction <add>, %31, %cst_21 [1] : vector<16x128xf32> to vector<16xf32>
    %33 = vector.shape_cast %32 : vector<16xf32> to vector<16x1xf32>
    %34 = tpu.concatenate %30, %33 in 1 : vector<16x1xf32>, vector<16x1xf32> -> vector<16x2xf32>
    %c0_22 = arith.constant 0 : index
    %c0_23 = arith.constant 0 : index
    %35 = vector.load %arg7[%c0_22, %c0_23] : memref<16x16xf32, #tpu.memory_space<vmem>>, vector<16x16xf32>
    %cst_24 = arith.constant dense<0.000000e+00> : vector<16x2xf32>
    %36 = tpu.matmul %35, %34, %cst_24 {dimension_numbers = #tpu.dot_dimension_numbers<[1], [0], [0], [1], [0, 0, 1, 1], [], []>} : vector<16x16xf32>, vector<16x2xf32>, vector<16x2xf32> -> vector<16x2xf32>
    %cst_25 = arith.constant 1.562500e-02 : f32
    %37 = vector.broadcast %cst_25 : f32 to vector<16x2xf32>
    %38 = arith.mulf %36, %37 : vector<16x2xf32>
    %39 = vector.extract_strided_slice %38 {offsets = [0, 0], sizes = [16, 1], strides = [1, 1]} : vector<16x2xf32> to vector<16x1xf32>
    %40 = vector.extract_strided_slice %38 {offsets = [0, 1], sizes = [16, 1], strides = [1, 1]} : vector<16x2xf32> to vector<16x1xf32>
    %41 = arith.mulf %39, %39 : vector<16x1xf32>
    %42 = arith.subf %40, %41 : vector<16x1xf32>
    %43 = vector.broadcast %39 : vector<16x1xf32> to vector<16x128xf32>
    %44 = arith.subf %25, %43 : vector<16x128xf32>
    %cst_26 = arith.constant 9.99999974E-6 : f32
    %45 = vector.broadcast %cst_26 : f32 to vector<16x1xf32>
    %46 = arith.addf %42, %45 : vector<16x1xf32>
    %47 = math.rsqrt %46 : vector<16x1xf32>
    %48 = vector.broadcast %47 : vector<16x1xf32> to vector<16x128xf32>
    %49 = arith.mulf %44, %48 : vector<16x128xf32>
    %c0_27 = arith.constant 0 : index
    %c0_28 = arith.constant 0 : index
    %50 = vector.load %arg5[%c0_27, %c0_28] : memref<16x1xf32, #tpu.memory_space<vmem>>, vector<16x1xf32>
    %51 = vector.broadcast %50 : vector<16x1xf32> to vector<16x128xf32>
    %52 = arith.mulf %49, %51 : vector<16x128xf32>
    %c0_29 = arith.constant 0 : index
    %c0_30 = arith.constant 0 : index
    %53 = vector.load %arg6[%c0_29, %c0_30] : memref<16x1xf32, #tpu.memory_space<vmem>>, vector<16x1xf32>
    %54 = vector.broadcast %53 : vector<16x1xf32> to vector<16x128xf32>
    %55 = arith.addf %52, %54 : vector<16x128xf32>
    %cst_31 = arith.constant 0.000000e+00 : f32
    %56 = vector.broadcast %cst_31 : f32 to vector<16x128xf32>
    %57 = arith.maximumf %55, %56 : vector<16x128xf32>
    %58 = arith.truncf %57 : vector<16x128xf32> to vector<16x128xbf16>
    %c0_32 = arith.constant 0 : index
    %c0_33 = arith.constant 0 : index
    %59 = vector.load %arg8[%c0_32, %c0_33] : memref<128x512xbf16, #tpu.memory_space<vmem>>, vector<128x512xbf16>
    %cst_34 = arith.constant dense<0.000000e+00> : vector<16x512xf32>
    %60 = tpu.matmul %58, %59, %cst_34 {dimension_numbers = #tpu.dot_dimension_numbers<[1], [0], [0], [1], [0, 0, 1, 1], [], []>} : vector<16x128xbf16>, vector<128x512xbf16>, vector<16x512xf32> -> vector<16x512xf32>
    %61 = arith.truncf %60 : vector<16x512xf32> to vector<16x512xbf16>
    %c0_35 = arith.constant 0 : index
    %c0_36 = arith.constant 0 : index
    %c0_37 = arith.constant 0 : index
    %62 = vector.load %arg9[%c0_35, %c0_36, %c0_37] : memref<1x16x512xbf16, #tpu.memory_space<vmem>>, vector<1x16x512xbf16>
    %63 = vector.shape_cast %62 : vector<1x16x512xbf16> to vector<16x512xbf16>
    %64 = vector.shape_cast %61 : vector<16x512xbf16> to vector<1x16x512xbf16>
    tpu.vector_store %arg9[%c0_35, %c0_36, %c0_37], %64 {strides = array<i32>} : memref<1x16x512xbf16, #tpu.memory_space<vmem>>, vector<1x16x512xbf16>,
    return
  }
  func.func @transform_0(%arg0: i32) -> (i32, i32, i32) {
    %c0_i32 = arith.constant 0 : i32
    %c0_i32_0 = arith.constant 0 : i32
    %c0_i32_1 = arith.constant 0 : i32
    return %arg0, %c0_i32, %c0_i32_0 : i32, i32, i32
  }
  func.func @transform_1(%arg0: i32) -> (i32, i32) {
    %c0_i32 = arith.constant 0 : i32
    %c0_i32_0 = arith.constant 0 : i32
    %c0_i32_1 = arith.constant 0 : i32
    return %c0_i32, %c0_i32_0 : i32, i32
  }
  func.func @transform_2(%arg0: i32) -> (i32, i32) {
    %c0_i32 = arith.constant 0 : i32
    %c0_i32_0 = arith.constant 0 : i32
    %c0_i32_1 = arith.constant 0 : i32
    return %c0_i32, %c0_i32_0 : i32, i32
  }
  func.func @transform_3(%arg0: i32) -> (i32, i32) {
    %c0_i32 = arith.constant 0 : i32
    %c0_i32_0 = arith.constant 0 : i32
    %c0_i32_1 = arith.constant 0 : i32
    return %c0_i32, %c0_i32_0 : i32, i32
  }
  func.func @transform_4(%arg0: i32) -> (i32, i32) {
    %c0_i32 = arith.constant 0 : i32
    %c0_i32_0 = arith.constant 0 : i32
    %c0_i32_1 = arith.constant 0 : i32
    return %c0_i32, %c0_i32_0 : i32, i32
  }
  func.func @transform_5(%arg0: i32) -> (i32, i32) {
    %c0_i32 = arith.constant 0 : i32
    %c0_i32_0 = arith.constant 0 : i32
    %c0_i32_1 = arith.constant 0 : i32
    return %c0_i32, %c0_i32_0 : i32, i32
  }
  func.func @transform_6(%arg0: i32) -> (i32, i32) {
    %c0_i32 = arith.constant 0 : i32
    %c0_i32_0 = arith.constant 0 : i32
    %c0_i32_1 = arith.constant 0 : i32
    return %c0_i32, %c0_i32_0 : i32, i32
  }
  func.func @transform_7(%arg0: i32) -> (i32, i32) {
    %c0_i32 = arith.constant 0 : i32
    %c0_i32_0 = arith.constant 0 : i32
    %c0_i32_1 = arith.constant 0 : i32
    return %c0_i32, %c0_i32_0 : i32, i32
  }
  func.func @transform_8(%arg0: i32) -> (i32, i32, i32) {
    %c0_i32 = arith.constant 0 : i32
    %c0_i32_0 = arith.constant 0 : i32
    %c0_i32_1 = arith.constant 0 : i32
    return %arg0, %c0_i32, %c0_i32_0 : i32, i32, i32
  }
}

</mosaic_0001>

<llo_original>
// kernel: tpu_custom_call.1
$region0: #{tpu_custom_call.1}
  #allocation0 [shape = 'u32[]', space=smem, size = 0x4, offset = 0x4, fixed_abs, tag = 'smem constant byte address 0x4 - core index']
  #allocation1 [shape = 'u32[72,128]{1,0:T(1,128)}', space=vmem, size = 0x9000, scoped, tag = 'internal scratch']
  #allocation2 [shape = 'bf16[288,128]{1,0:T(8,128)(2,1)}', space=vmem, size = 0x12000, scoped, tag = 'scratch operand']
  %s0 = inlined_call_operand.hbm [shape: bf16[2,32,256], index: 0, kind: input, shape index: {}]
  %s1 = inlined_call_operand.vmem [shape: bf16[16,288], index: 1, kind: input, shape index: {}]
  %s2 = inlined_call_operand.vmem [shape: f32[16,1], index: 2, kind: input, shape index: {}]
  %s3 = inlined_call_operand.vmem [shape: f32[1,128], index: 3, kind: input, shape index: {}]
  %s4 = inlined_call_operand.vmem [shape: f32[16,1], index: 4, kind: input, shape index: {}]
  %s5 = inlined_call_operand.vmem [shape: f32[16,1], index: 5, kind: input, shape index: {}]
  %s6 = inlined_call_operand.vmem [shape: f32[16,16], index: 6, kind: input, shape index: {}]
  %s7 = inlined_call_operand.hbm [shape: bf16[128,512], index: 7, kind: input, shape index: {}]
  %s8 = inlined_call_operand.hbm [shape: bf16[2,16,512], index: 8, kind: output, shape index: {}]
  %s9 = sld [smem:[#allocation0]]
  $region73: #{tpu_custom_call.1} parent=0
    _
  %s11 = ssub.s32 1, %s9
  %s12 = scalar_select 0, %s11, %s9
  $region1: #{tpu_custom_call.1} parent=0
    #allocation3 [shape = 'u8[32768]{0}', space=vmem, size = 0x8000, scoped, tag = 'input window, operand 0']
    #allocation4 [shape = 's32[2]{0}', space=sflag, size = 0x8, scoped, tag = 'scoped memory for tpu_custom_call.1']
    #allocation5 [shape = 's32[2]{0}', space=sflag, size = 0x8, scoped, tag = 'scoped memory for tpu_custom_call.1']
    #allocation6 [shape = 'u8[131072]{0}', space=vmem, size = 0x20000, scoped, tag = 'input window, operand 7, single buffered']
    #allocation7 [shape = 's32[1]{0}', space=sflag, size = 0x4, scoped, tag = 'scoped memory for tpu_custom_call.1']
    #allocation8 [shape = 'u8[32768]{0}', space=vmem, size = 0x8000, scoped, tag = 'output window, operand 0']
    %13 = vsyncpa [#allocation4], 0
    %s14 = scalar_lea.sflag [#allocation4], 1
    %15 = vsyncpa %s14, 0
    %16 = vsyncpa [#allocation7], 0
    %17 = vsyncpa [#allocation5], 0
    %s18 = scalar_lea.sflag [#allocation5], 1
    %19 = vsyncpa %s18, 0
    loop: start=0, step=1, limit=4
    $region2: #{tpu_custom_call.1} parent=1 // loop_pre_header
      _
    $region3: #{tpu_custom_call.1} parent=1 // loop_header
      %s21 = sphi 0, %s25
      %p22 = scmp.ge.s32.totalorder %s21, 4
      %s31 = sphi 0, %s33
      %s34 = sphi 0, %s31
      %s35 = sphi 0, %s34
      %s51 = sphi 0, %s35
      %s55 = sphi 0, %s55
      %s57 = sphi 0, %s55
      %s58 = sphi 0, %s57
      %s72 = sphi 0, %s58
      %s76 = sphi 0, %s76
      %s78 = sphi 0, %s76
      %s79 = sphi 0, %s78
      %s93 = sphi 0, %s79
      %s97 = sphi 0, %s97
      %s99 = sphi 0, %s97
      %s100 = sphi 0, %s99
      %s114 = sphi 0, %s100
      %s118 = sphi 0, %s118
      %s120 = sphi 0, %s118
      %s121 = sphi 0, %s120
      %s135 = sphi 0, %s121
      %s139 = sphi 0, %s139
      %s141 = sphi 0, %s139
      %s142 = sphi 0, %s141
      %s156 = sphi 0, %s142
      %s160 = sphi 0, %s160
      %s162 = sphi 0, %s160
      %s163 = sphi 0, %s162
      %s177 = sphi 0, %s163
      %s181 = sphi 0, %s181
      %s183 = sphi 0, %s181
      %s184 = sphi 0, %s183
      %s198 = sphi 0, %s184
      %s204 = sphi 0, %s206
      %s207 = sphi 0, %s204
      %s208 = sphi 0, %s207
      %s224 = sphi 0, %s208
    $region4: #{tpu_custom_call.1} parent=1 // loop_header_branch
      %24 = sbr.rel (%p22) target = $region8
    $region5: #{tpu_custom_call.1} parent=1 // loop_body
      %s26 = ssub.s32 %s21, 1
      %s27 = ssub.s32 %s21, 2
      %s28 = sadd.s32 %s21, 1
      %s29 = ssub.s32 %s21, %s28
      %p30 = scmp.eq.s32.totalorder %s29, 0
      %s32 = sadd.s32 %s31, 1
      %s33 = scalar_select %p30, %s31, %s32
      %p36 = pneg %p30
      %p37 = scmp.eq.s32.totalorder %s21, 1
      %p38 = por %p36, %p37
      %p39 = scmp.ne.s32.totalorder %s31, %s34
      %p40 = scmp.eq.s32.totalorder %s21, 0
      %p41 = por %p39, %p40
      %p42 = scmp.ne.s32.totalorder %s31, %s34
      %p43 = scmp.eq.s32.totalorder %s26, 1
      %p44 = por %p42, %p43
      %p45 = scmp.ne.s32.totalorder %s34, %s35
      %p46 = scmp.eq.s32.totalorder %s26, 0
      %p47 = por %p45, %p46
      %p48 = scmp.ne.s32.totalorder %s34, %s35
      %p49 = scmp.eq.s32.totalorder %s27, 1
      %p50 = por %p48, %p49
      %p52 = scmp.ne.s32.totalorder %s35, %s51
      %p53 = scmp.eq.s32.totalorder %s27, 0
      %p54 = por %p52, %p53
      %s56 = sadd.s32 %s55, 1
      %p59 = scmp.eq.s32.totalorder %s21, 1
      %p60 = scmp.ne.s32.totalorder %s55, %s57
      %p61 = scmp.eq.s32.totalorder %s21, 0
      %p62 = por %p60, %p61
      %p63 = scmp.ne.s32.totalorder %s55, %s57
      %p64 = scmp.eq.s32.totalorder %s26, 1
      %p65 = por %p63, %p64
      %p66 = scmp.ne.s32.totalorder %s57, %s58
      %p67 = scmp.eq.s32.totalorder %s26, 0
      %p68 = por %p66, %p67
      %p69 = scmp.ne.s32.totalorder %s57, %s58
      %p70 = scmp.eq.s32.totalorder %s27, 1
      %p71 = por %p69, %p70
      %p73 = scmp.ne.s32.totalorder %s58, %s72
      %p74 = scmp.eq.s32.totalorder %s27, 0
      %p75 = por %p73, %p74
      %s77 = sadd.s32 %s76, 1
      %p80 = scmp.eq.s32.totalorder %s21, 1
      %p81 = scmp.ne.s32.totalorder %s76, %s78
      %p82 = scmp.eq.s32.totalorder %s21, 0
      %p83 = por %p81, %p82
      %p84 = scmp.ne.s32.totalorder %s76, %s78
      %p85 = scmp.eq.s32.totalorder %s26, 1
      %p86 = por %p84, %p85
      %p87 = scmp.ne.s32.totalorder %s78, %s79
      %p88 = scmp.eq.s32.totalorder %s26, 0
      %p89 = por %p87, %p88
      %p90 = scmp.ne.s32.totalorder %s78, %s79
      %p91 = scmp.eq.s32.totalorder %s27, 1
      %p92 = por %p90, %p91
      %p94 = scmp.ne.s32.totalorder %s79, %s93
      %p95 = scmp.eq.s32.totalorder %s27, 0
      %p96 = por %p94, %p95
      %s98 = sadd.s32 %s97, 1
      %p101 = scmp.eq.s32.totalorder %s21, 1
      %p102 = scmp.ne.s32.totalorder %s97, %s99
      %p103 = scmp.eq.s32.totalorder %s21, 0
      %p104 = por %p102, %p103
      %p105 = scmp.ne.s32.totalorder %s97, %s99
      %p106 = scmp.eq.s32.totalorder %s26, 1
      %p107 = por %p105, %p106
      %p108 = scmp.ne.s32.totalorder %s99, %s100
      %p109 = scmp.eq.s32.totalorder %s26, 0
      %p110 = por %p108, %p109
      %p111 = scmp.ne.s32.totalorder %s99, %s100
      %p112 = scmp.eq.s32.totalorder %s27, 1
      %p113 = por %p111, %p112
      %p115 = scmp.ne.s32.totalorder %s100, %s114
      %p116 = scmp.eq.s32.totalorder %s27, 0
      %p117 = por %p115, %p116
      %s119 = sadd.s32 %s118, 1
      %p122 = scmp.eq.s32.totalorder %s21, 1
      %p123 = scmp.ne.s32.totalorder %s118, %s120
      %p124 = scmp.eq.s32.totalorder %s21, 0
      %p125 = por %p123, %p124
      %p126 = scmp.ne.s32.totalorder %s118, %s120
      %p127 = scmp.eq.s32.totalorder %s26, 1
      %p128 = por %p126, %p127
      %p129 = scmp.ne.s32.totalorder %s120, %s121
      %p130 = scmp.eq.s32.totalorder %s26, 0
      %p131 = por %p129, %p130
      %p132 = scmp.ne.s32.totalorder %s120, %s121
      %p133 = scmp.eq.s32.totalorder %s27, 1
      %p134 = por %p132, %p133
      %p136 = scmp.ne.s32.totalorder %s121, %s135
      %p137 = scmp.eq.s32.totalorder %s27, 0
      %p138 = por %p136, %p137
      %s140 = sadd.s32 %s139, 1
      %p143 = scmp.eq.s32.totalorder %s21, 1
      %p144 = scmp.ne.s32.totalorder %s139, %s141
      %p145 = scmp.eq.s32.totalorder %s21, 0
      %p146 = por %p144, %p145
      %p147 = scmp.ne.s32.totalorder %s139, %s141
      %p148 = scmp.eq.s32.totalorder %s26, 1
      %p149 = por %p147, %p148
      %p150 = scmp.ne.s32.totalorder %s141, %s142
      %p151 = scmp.eq.s32.totalorder %s26, 0
      %p152 = por %p150, %p151
      %p153 = scmp.ne.s32.totalorder %s141, %s142
      %p154 = scmp.eq.s32.totalorder %s27, 1
      %p155 = por %p153, %p154
      %p157 = scmp.ne.s32.totalorder %s142, %s156
      %p158 = scmp.eq.s32.totalorder %s27, 0
      %p159 = por %p157, %p158
      %s161 = sadd.s32 %s160, 1
      %p164 = scmp.eq.s32.totalorder %s21, 1
      %p165 = scmp.ne.s32.totalorder %s160, %s162
      %p166 = scmp.eq.s32.totalorder %s21, 0
      %p167 = por %p165, %p166
      %p168 = scmp.ne.s32.totalorder %s160, %s162
      %p169 = scmp.eq.s32.totalorder %s26, 1
      %p170 = por %p168, %p169
      %p171 = scmp.ne.s32.totalorder %s162, %s163
      %p172 = scmp.eq.s32.totalorder %s26, 0
      %p173 = por %p171, %p172
      %p174 = scmp.ne.s32.totalorder %s162, %s163
      %p175 = scmp.eq.s32.totalorder %s27, 1
      %p176 = por %p174, %p175
      %p178 = scmp.ne.s32.totalorder %s163, %s177
      %p179 = scmp.eq.s32.totalorder %s27, 0
      %p180 = por %p178, %p179
      %s182 = sadd.s32 %s181, 1
      %p185 = scmp.eq.s32.totalorder %s21, 1
      %p186 = scmp.ne.s32.totalorder %s181, %s183
      %p187 = scmp.eq.s32.totalorder %s21, 0
      %p188 = por %p186, %p187
      %p189 = scmp.ne.s32.totalorder %s181, %s183
      %p190 = scmp.eq.s32.totalorder %s26, 1
      %p191 = por %p189, %p190
      %p192 = scmp.ne.s32.totalorder %s183, %s184
      %p193 = scmp.eq.s32.totalorder %s26, 0
      %p194 = por %p192, %p193
      %p195 = scmp.ne.s32.totalorder %s183, %s184
      %p196 = scmp.eq.s32.totalorder %s27, 1
      %p197 = por %p195, %p196
      %p199 = scmp.ne.s32.totalorder %s184, %s198
      %p200 = scmp.eq.s32.totalorder %s27, 0
      %p201 = por %p199, %p200
      %s202 = ssub.s32 %s21, %s28
      %p203 = scmp.eq.s32.totalorder %s202, 0
      %s205 = sadd.s32 %s204, 1
      %s206 = scalar_select %p203, %s204, %s205
      %p209 = pneg %p203
      %p210 = scmp.eq.s32.totalorder %s21, 1
      %p211 = por %p209, %p210
      %p212 = scmp.ne.s32.totalorder %s204, %s207
      %p213 = scmp.eq.s32.totalorder %s21, 0
      %p214 = por %p212, %p213
      %p215 = scmp.ne.s32.totalorder %s204, %s207
      %p216 = scmp.eq.s32.totalorder %s26, 1
      %p217 = por %p215, %p216
      %p218 = scmp.ne.s32.totalorder %s207, %s208
      %p219 = scmp.eq.s32.totalorder %s26, 0
      %p220 = por %p218, %p219
      %p221 = scmp.ne.s32.totalorder %s207, %s208
      %p222 = scmp.eq.s32.totalorder %s27, 1
      %p223 = por %p221, %p222
      %p225 = scmp.ne.s32.totalorder %s208, %s224
      %p226 = scmp.eq.s32.totalorder %s27, 0
      %p227 = por %p225, %p226
      %p228 = scmp.le.s32.totalorder 1, %s21
      %p229 = scmp.lt.s32.totalorder %s21, 3
      %p230 = pnand %p228, %p229
      %p231 = pneg %p230
      // Predicated region
      $region9: #{tpu_custom_call.1} parent=5 // pred_check
        _
      $region10: #{tpu_custom_call.1} parent=5 // pred_check_branch
        %233 = sbr.rel (%p230) target = $region12
      $region11: #{tpu_custom_call.1} parent=5 // pred_region
        %s234 = ssub.s32 %s21, 1
        // Predicated region
        $region13: #{tpu_custom_call.1} parent=11 // pred_check
          %p235 = pneg %p68
        $region14: #{tpu_custom_call.1} parent=11 // pred_check_branch
          %237 = sbr.rel (%p235) target = $region16
        $region15: #{tpu_custom_call.1} parent=11 // pred_region
          _
        $region16: #{tpu_custom_call.1} parent=11 // pred_fallthru
          _
        // Predicated region
        $region17: #{tpu_custom_call.1} parent=11 // pred_check
          %p238 = pneg %p89
        $region18: #{tpu_custom_call.1} parent=11 // pred_check_branch
          %240 = sbr.rel (%p238) target = $region20
        $region19: #{tpu_custom_call.1} parent=11 // pred_region
          _
        $region20: #{tpu_custom_call.1} parent=11 // pred_fallthru
          _
        // Predicated region
        $region21: #{tpu_custom_call.1} parent=11 // pred_check
          %p241 = pneg %p110
        $region22: #{tpu_custom_call.1} parent=11 // pred_check_branch
          %243 = sbr.rel (%p241) target = $region24
        $region23: #{tpu_custom_call.1} parent=11 // pred_region
          _
        $region24: #{tpu_custom_call.1} parent=11 // pred_fallthru
          _
        // Predicated region
        $region25: #{tpu_custom_call.1} parent=11 // pred_check
          %p244 = pneg %p131
        $region26: #{tpu_custom_call.1} parent=11 // pred_check_branch
          %246 = sbr.rel (%p244) target = $region28
        $region27: #{tpu_custom_call.1} parent=11 // pred_region
          _
        $region28: #{tpu_custom_call.1} parent=11 // pred_fallthru
          _
        // Predicated region
        $region29: #{tpu_custom_call.1} parent=11 // pred_check
          %p247 = pneg %p152
        $region30: #{tpu_custom_call.1} parent=11 // pred_check_branch
          %249 = sbr.rel (%p247) target = $region32
        $region31: #{tpu_custom_call.1} parent=11 // pred_region
          _
        $region32: #{tpu_custom_call.1} parent=11 // pred_fallthru
          _
        // Predicated region
        $region33: #{tpu_custom_call.1} parent=11 // pred_check
          %p250 = pneg %p173
        $region34: #{tpu_custom_call.1} parent=11 // pred_check_branch
          %252 = sbr.rel (%p250) target = $region36
        $region35: #{tpu_custom_call.1} parent=11 // pred_region
          _
        $region36: #{tpu_custom_call.1} parent=11 // pred_fallthru
          _
        // Predicated region
        $region37: #{tpu_custom_call.1} parent=11 // pred_check
          %p253 = pneg %p194
        $region38: #{tpu_custom_call.1} parent=11 // pred_check_branch
          %255 = sbr.rel (%p253) target = $region40
        $region39: #{tpu_custom_call.1} parent=11 // pred_region
          %257 = vsyncadd [#allocation7], 0
          %s258 = sshll.u32 %s7, 4
          %s259 = int_to_ptr.hbm [resolvable:$true] %s258
          %s260 = sshll.u32 [#allocation6], 4
          %s261 = int_to_ptr.vmem [resolvable:$true] %s260
          %266 = dma.hbm_to_vmem [thread:$0]  %s259, 4096, %s261, [#allocation7], 256, 256, 16
        $region40: #{tpu_custom_call.1} parent=11 // pred_fallthru
          _
      $region12: #{tpu_custom_call.1} parent=5 // pred_fallthru
        _
      %p267 = scmp.lt.s32.totalorder %s21, 2
      // Predicated region
      $region41: #{tpu_custom_call.1} parent=5 // pred_check
        %p268 = pneg %p267
      $region42: #{tpu_custom_call.1} parent=5 // pred_check_branch
        %270 = sbr.rel (%p268) target = $region44
      $region43: #{tpu_custom_call.1} parent=5 // pred_region
        // Predicated region
        $region45: #{tpu_custom_call.1} parent=43 // pred_check
          %p271 = pneg %p41
        $region46: #{tpu_custom_call.1} parent=43 // pred_check_branch
          %273 = sbr.rel (%p271) target = $region48
        $region47: #{tpu_custom_call.1} parent=43 // pred_region
          %s274 = sand.u32 %s31, 1
          %s275 = scalar_lea.sflag [#allocation4], %s274
          %s276 = sand.u32 %s31, 1
          %s277 = smul.addr %s276, 32
          %s278 = scalar_lea.vmem [#allocation3], %s277
          %280 = vsyncadd %s275, 0
          %s281 = smul.addr %s21, 8
          %s282 = smul.addr %s281, 4
          %s283 = scalar_lea.hbm %s0, %s282
          %s284 = sshll.u32 %s283, 4
          %s285 = int_to_ptr.hbm [resolvable:$true] %s284
          %s286 = sshll.u32 %s278, 4
          %s287 = int_to_ptr.vmem [resolvable:$true] %s286
          %292 = dma.hbm_to_vmem [thread:$0]  %s285, 512, %s287, %s275, 128, 128, 8
        $region48: #{tpu_custom_call.1} parent=43 // pred_fallthru
          _
      $region44: #{tpu_custom_call.1} parent=5 // pred_fallthru
        _
      %p293 = scmp.le.s32.totalorder 1, %s21
      %p294 = scmp.lt.s32.totalorder %s21, 3
      %p295 = pnand %p293, %p294
      %p296 = pneg %p295
      // Predicated region
      $region49: #{tpu_custom_call.1} parent=5 // pred_check
        _
      $region50: #{tpu_custom_call.1} parent=5 // pred_check_branch
        %298 = sbr.rel (%p295) target = $region52
      $region51: #{tpu_custom_call.1} parent=5 // pred_region
        %s299 = ssub.s32 %s21, 1
        %s300 = sand.u32 %s34, 1
        %s301 = scalar_lea.sflag [#allocation4], %s300
        %s302 = sand.u32 %s34, 1
        %s303 = smul.addr %s302, 32
        %s304 = scalar_lea.vmem [#allocation3], %s303
        // Predicated region
        $region53: #{tpu_custom_call.1} parent=51 // pred_check
          %p305 = pneg %p47
        $region54: #{tpu_custom_call.1} parent=51 // pred_check_branch
          %307 = sbr.rel (%p305) target = $region56
        $region55: #{tpu_custom_call.1} parent=51 // pred_region
          %309 = dma.done %s301, 512
        $region56: #{tpu_custom_call.1} parent=51 // pred_fallthru
          _
        // Predicated region
        $region57: #{tpu_custom_call.1} parent=51 // pred_check
          %p310 = pneg %p194
        $region58: #{tpu_custom_call.1} parent=51 // pred_check_branch
          %312 = sbr.rel (%p310) target = $region60
        $region59: #{tpu_custom_call.1} parent=51 // pred_region
          %314 = dma.done [#allocation7], 4096
        $region60: #{tpu_custom_call.1} parent=51 // pred_fallthru
          _
        %s315 = sand.u32 %s34, 1
        %s316 = scalar_lea.sflag [#allocation4], %s315
        %s317 = sand.u32 %s34, 1
        %s318 = smul.addr %s317, 32
        %s319 = scalar_lea.vmem [#allocation3], %s318
        %p320 = pneg %p47
        %p321 = pneg %p44
        %p322 = pneg %p68
        %p323 = pneg %p65
        %p324 = pneg %p89
        %p325 = pneg %p86
        %p326 = pneg %p110
        %p327 = pneg %p107
        %p328 = pneg %p131
        %p329 = pneg %p128
        %p330 = pneg %p152
        %p331 = pneg %p149
        %p332 = pneg %p173
        %p333 = pneg %p170
        %p334 = pneg %p194
        %p335 = pneg %p191
        %p336 = pneg %p220
        %p337 = pneg %p217
        %s338 = sand.u32 %s207, 1
        %s339 = scalar_lea.sflag [#allocation5], %s338
        %s340 = sand.u32 %s207, 1
        %s341 = smul.addr %s340, 32
        %s342 = scalar_lea.vmem [#allocation8], %s341
        %v344 = vld [vmem:[%s304] sm:$0xff]
        %v345 = vld [vmem:[%s304 + $0x8] sm:$0xff]
        %v346 = vld [vmem:[%s304 + $0x10] sm:$0xff]
        %v347 = vld [vmem:[%s304 + $0x18] sm:$0xff]
        %348 = vst [vmem:[#allocation2] sm:$0xf] %v344
        %349 = vst [vmem:[#allocation2 + $0x4] sm:$0xf] %v345
        %350 = vst [vmem:[#allocation2 + $0x8] sm:$0xf] %v346
        %351 = vst [vmem:[#allocation2 + $0xc] sm:$0xf] %v347
        %356 = vrot.lane.b32.xlu0 %v344, 127
        %v357 = vpop.permute.xlu0 %356
        %358 = vrot.lane.b32.xlu0 %v345, 127
        %v359 = vpop.permute.xlu0 %358
        %360 = vrot.lane.b32.xlu0 %v346, 127
        %v361 = vpop.permute.xlu0 %360
        %362 = vrot.lane.b32.xlu0 %v347, 127
        %v363 = vpop.permute.xlu0 %362
        %v364 = vrot.slane %v357, 4
        %v365 = vrot.slane %v359, 4
        %v366 = vrot.slane %v361, 4
        %v367 = vrot.slane %v363, 4
        %vm368 = vcmask 1039360
        %v369 = vsel %vm368, %v357, %v364
        %v370 = vsel %vm368, %v359, %v365
        %v371 = vsel %vm368, %v361, %v366
        %v372 = vsel %vm368, %v363, %v367
        %377 = vst [vmem:[#allocation2 + $0x10] sm:$0xf] %v369
        %378 = vst [vmem:[#allocation2 + $0x14] sm:$0xf] %v370
        %379 = vst [vmem:[#allocation2 + $0x18] sm:$0xf] %v371
        %380 = vst [vmem:[#allocation2 + $0x1c] sm:$0xf] %v372
        %381 = vrot.lane.b32.xlu0 %v344, 126
        %v382 = vpop.permute.xlu0 %381
        %383 = vrot.lane.b32.xlu0 %v345, 126
        %v384 = vpop.permute.xlu0 %383
        %385 = vrot.lane.b32.xlu0 %v346, 126
        %v386 = vpop.permute.xlu0 %385
        %387 = vrot.lane.b32.xlu0 %v347, 126
        %v388 = vpop.permute.xlu0 %387
        %v389 = vrot.slane %v382, 4
        %v390 = vrot.slane %v384, 4
        %v391 = vrot.slane %v386, 4
        %v392 = vrot.slane %v388, 4
        %vm393 = vcmask 1031168
        %v394 = vsel %vm393, %v382, %v389
        %v395 = vsel %vm393, %v384, %v390
        %v396 = vsel %vm393, %v386, %v391
        %v397 = vsel %vm393, %v388, %v392
        %402 = vst [vmem:[#allocation2 + $0x20] sm:$0xf] %v394
        %403 = vst [vmem:[#allocation2 + $0x24] sm:$0xf] %v395
        %404 = vst [vmem:[#allocation2 + $0x28] sm:$0xf] %v396
        %405 = vst [vmem:[#allocation2 + $0x2c] sm:$0xf] %v397
        %406 = vrot.lane.b32.xlu0 %v344, 112
        %v407 = vpop.permute.xlu0 %406
        %408 = vrot.lane.b32.xlu0 %v345, 112
        %v409 = vpop.permute.xlu0 %408
        %410 = vrot.lane.b32.xlu0 %v346, 112
        %v411 = vpop.permute.xlu0 %410
        %412 = vrot.lane.b32.xlu0 %v347, 112
        %v413 = vpop.permute.xlu0 %412
        %v414 = vrot.slane %v407, 4
        %v415 = vrot.slane %v409, 4
        %v416 = vrot.slane %v411, 4
        %v417 = vrot.slane %v413, 4
        %vm418 = vcmask 916480
        %v419 = vsel %vm418, %v407, %v414
        %v420 = vsel %vm418, %v409, %v415
        %v421 = vsel %vm418, %v411, %v416
        %v422 = vsel %vm418, %v413, %v417
        %427 = vst [vmem:[#allocation2 + $0x30] sm:$0xf] %v419
        %428 = vst [vmem:[#allocation2 + $0x34] sm:$0xf] %v420
        %429 = vst [vmem:[#allocation2 + $0x38] sm:$0xf] %v421
        %430 = vst [vmem:[#allocation2 + $0x3c] sm:$0xf] %v422
        %431 = vrot.lane.b32.xlu0 %v344, 111
        %v432 = vpop.permute.xlu0 %431
        %433 = vrot.lane.b32.xlu0 %v345, 111
        %v434 = vpop.permute.xlu0 %433
        %435 = vrot.lane.b32.xlu0 %v346, 111
        %v436 = vpop.permute.xlu0 %435
        %437 = vrot.lane.b32.xlu0 %v347, 111
        %v438 = vpop.permute.xlu0 %437
        %v439 = vrot.slane %v432, 4
        %v440 = vrot.slane %v434, 4
        %v441 = vrot.slane %v436, 4
        %v442 = vrot.slane %v438, 4
        %vm443 = vcmask 908288
        %v444 = vsel %vm443, %v432, %v439
        %v445 = vsel %vm443, %v434, %v440
        %v446 = vsel %vm443, %v436, %v441
        %v447 = vsel %vm443, %v438, %v442
        %452 = vst [vmem:[#allocation2 + $0x40] sm:$0xf] %v444
        %453 = vst [vmem:[#allocation2 + $0x44] sm:$0xf] %v445
        %454 = vst [vmem:[#allocation2 + $0x48] sm:$0xf] %v446
        %455 = vst [vmem:[#allocation2 + $0x4c] sm:$0xf] %v447
        %456 = vrot.lane.b32.xlu0 %v344, 110
        %v457 = vpop.permute.xlu0 %456
        %458 = vrot.lane.b32.xlu0 %v345, 110
        %v459 = vpop.permute.xlu0 %458
        %460 = vrot.lane.b32.xlu0 %v346, 110
        %v461 = vpop.permute.xlu0 %460
        %462 = vrot.lane.b32.xlu0 %v347, 110
        %v463 = vpop.permute.xlu0 %462
        %v464 = vrot.slane %v457, 4
        %v465 = vrot.slane %v459, 4
        %v466 = vrot.slane %v461, 4
        %v467 = vrot.slane %v463, 4
        %vm468 = vcmask 900096
        %v469 = vsel %vm468, %v457, %v464
        %v470 = vsel %vm468, %v459, %v465
        %v471 = vsel %vm468, %v461, %v466
        %v472 = vsel %vm468, %v463, %v467
        %477 = vst [vmem:[#allocation2 + $0x50] sm:$0xf] %v469
        %478 = vst [vmem:[#allocation2 + $0x54] sm:$0xf] %v470
        %479 = vst [vmem:[#allocation2 + $0x58] sm:$0xf] %v471
        %480 = vst [vmem:[#allocation2 + $0x5c] sm:$0xf] %v472
        %481 = vrot.lane.b32.xlu0 %v344, 96
        %v482 = vpop.permute.xlu0 %481
        %483 = vrot.lane.b32.xlu0 %v345, 96
        %v484 = vpop.permute.xlu0 %483
        %485 = vrot.lane.b32.xlu0 %v346, 96
        %v486 = vpop.permute.xlu0 %485
        %487 = vrot.lane.b32.xlu0 %v347, 96
        %v488 = vpop.permute.xlu0 %487
        %v489 = vrot.slane %v482, 4
        %v490 = vrot.slane %v484, 4
        %v491 = vrot.slane %v486, 4
        %v492 = vrot.slane %v488, 4
        %vm493 = vcmask 785408
        %v494 = vsel %vm493, %v482, %v489
        %v495 = vsel %vm493, %v484, %v490
        %v496 = vsel %vm493, %v486, %v491
        %v497 = vsel %vm493, %v488, %v492
        %502 = vst [vmem:[#allocation2 + $0x60] sm:$0xf] %v494
        %503 = vst [vmem:[#allocation2 + $0x64] sm:$0xf] %v495
        %504 = vst [vmem:[#allocation2 + $0x68] sm:$0xf] %v496
        %505 = vst [vmem:[#allocation2 + $0x6c] sm:$0xf] %v497
        %506 = vrot.lane.b32.xlu0 %v344, 95
        %v507 = vpop.permute.xlu0 %506
        %508 = vrot.lane.b32.xlu0 %v345, 95
        %v509 = vpop.permute.xlu0 %508
        %510 = vrot.lane.b32.xlu0 %v346, 95
        %v511 = vpop.permute.xlu0 %510
        %512 = vrot.lane.b32.xlu0 %v347, 95
        %v513 = vpop.permute.xlu0 %512
        %v514 = vrot.slane %v507, 4
        %v515 = vrot.slane %v509, 4
        %v516 = vrot.slane %v511, 4
        %v517 = vrot.slane %v513, 4
        %vm518 = vcmask 777216
        %v519 = vsel %vm518, %v507, %v514
        %v520 = vsel %vm518, %v509, %v515
        %v521 = vsel %vm518, %v511, %v516
        %v522 = vsel %vm518, %v513, %v517
        %527 = vst [vmem:[#allocation2 + $0x70] sm:$0xf] %v519
        %528 = vst [vmem:[#allocation2 + $0x74] sm:$0xf] %v520
        %529 = vst [vmem:[#allocation2 + $0x78] sm:$0xf] %v521
        %530 = vst [vmem:[#allocation2 + $0x7c] sm:$0xf] %v522
        %531 = vrot.lane.b32.xlu0 %v344, 94
        %v532 = vpop.permute.xlu0 %531
        %533 = vrot.lane.b32.xlu0 %v345, 94
        %v534 = vpop.permute.xlu0 %533
        %535 = vrot.lane.b32.xlu0 %v346, 94
        %v536 = vpop.permute.xlu0 %535
        %537 = vrot.lane.b32.xlu0 %v347, 94
        %v538 = vpop.permute.xlu0 %537
        %v539 = vrot.slane %v532, 4
        %v540 = vrot.slane %v534, 4
        %v541 = vrot.slane %v536, 4
        %v542 = vrot.slane %v538, 4
        %vm543 = vcmask 769024
        %v544 = vsel %vm543, %v532, %v539
        %v545 = vsel %vm543, %v534, %v540
        %v546 = vsel %vm543, %v536, %v541
        %v547 = vsel %vm543, %v538, %v542
        %552 = vst [vmem:[#allocation2 + $0x80] sm:$0xf] %v544
        %553 = vst [vmem:[#allocation2 + $0x84] sm:$0xf] %v545
        %554 = vst [vmem:[#allocation2 + $0x88] sm:$0xf] %v546
        %555 = vst [vmem:[#allocation2 + $0x8c] sm:$0xf] %v547
        %v556 = vld [vmem:[%s1] sm:$0xff]
        %v557 = vld [vmem:[%s1 + $0x8] sm:$0xf]
        %v558 = vld [vmem:[%s1 + $0xc] sm:$0xff]
        %v559 = vld [vmem:[%s1 + $0x14] sm:$0xf]
        %v560 = vld [vmem:[#allocation2] sm:$0xf]
        %v561 = vld [vmem:[#allocation2 + $0x4] sm:$0xf]
        %v562 = vld [vmem:[#allocation2 + $0x8] sm:$0xf]
        %v563 = vld [vmem:[#allocation2 + $0xc] sm:$0xf]
        %v564 = vld [vmem:[#allocation2 + $0x10] sm:$0xf]
        %v565 = vld [vmem:[#allocation2 + $0x14] sm:$0xf]
        %v566 = vld [vmem:[#allocation2 + $0x18] sm:$0xf]
        %v567 = vld [vmem:[#allocation2 + $0x1c] sm:$0xf]
        %v568 = vld [vmem:[#allocation2 + $0x20] sm:$0xf]
        %v569 = vld [vmem:[#allocation2 + $0x24] sm:$0xf]
        %v570 = vld [vmem:[#allocation2 + $0x28] sm:$0xf]
        %v571 = vld [vmem:[#allocation2 + $0x2c] sm:$0xf]
        %v572 = vld [vmem:[#allocation2 + $0x30] sm:$0xf]
        %v573 = vld [vmem:[#allocation2 + $0x34] sm:$0xf]
        %v574 = vld [vmem:[#allocation2 + $0x38] sm:$0xf]
        %v575 = vld [vmem:[#allocation2 + $0x3c] sm:$0xf]
        %v576 = vld [vmem:[#allocation2 + $0x40] sm:$0xf]
        %v577 = vld [vmem:[#allocation2 + $0x44] sm:$0xf]
        %v578 = vld [vmem:[#allocation2 + $0x48] sm:$0xf]
        %v579 = vld [vmem:[#allocation2 + $0x4c] sm:$0xf]
        %v580 = vld [vmem:[#allocation2 + $0x50] sm:$0xf]
        %v581 = vld [vmem:[#allocation2 + $0x54] sm:$0xf]
        %v582 = vld [vmem:[#allocation2 + $0x58] sm:$0xf]
        %v583 = vld [vmem:[#allocation2 + $0x5c] sm:$0xf]
        %v584 = vld [vmem:[#allocation2 + $0x60] sm:$0xf]
        %v585 = vld [vmem:[#allocation2 + $0x64] sm:$0xf]
        %v586 = vld [vmem:[#allocation2 + $0x68] sm:$0xf]
        %v587 = vld [vmem:[#allocation2 + $0x6c] sm:$0xf]
        %v588 = vld [vmem:[#allocation2 + $0x70] sm:$0xf]
        %v589 = vld [vmem:[#allocation2 + $0x74] sm:$0xf]
        %v590 = vld [vmem:[#allocation2 + $0x78] sm:$0xf]
        %v591 = vld [vmem:[#allocation2 + $0x7c] sm:$0xf]
        %v592 = vld [vmem:[#allocation2 + $0x80] sm:$0xf]
        %v593 = vld [vmem:[#allocation2 + $0x84] sm:$0xf]
        %v594 = vld [vmem:[#allocation2 + $0x88] sm:$0xf]
        %v595 = vld [vmem:[#allocation2 + $0x8c] sm:$0xf]
        %v596 = vld [vmem:[%s2] sm:$0xff]
        %v597 = vld [vmem:[%s2 + $0x8] sm:$0xff]
        %599 = vset.pattern.permute.xlu0 0
        %600 = vperm.xlu0 %599, %v596
        %v601 = vpop.permute.xlu0 %600
        %604 = vset.pattern.permute.xlu0 0
        %605 = vperm.xlu0 %604, %v597
        %v606 = vpop.permute.xlu0 %605
        %v612 = vunpack.c.l.b16 %v556
        %v613 = vunpack.c.h.b16 %v556
        %v614 = vunpack.c.l.b16 %v557
        %v615 = vunpack.c.l.b16 %v558
        %v616 = vunpack.c.h.b16 %v558
        %v617 = vunpack.c.l.b16 %v559
        %v618 = vpack.c.b16 %v615, %v612
        %v619 = vpack.c.b16 %v616, %v613
        %v620 = vpack.c.b16 %v617, %v614
        %v659 = vunpack.c.l.b16 %v560
        %v660 = vunpack.c.l.b16 %v561
        %v661 = vunpack.c.l.b16 %v562
        %v662 = vunpack.c.l.b16 %v563
        %v663 = vunpack.c.l.b16 %v564
        %v664 = vunpack.c.l.b16 %v565
        %v665 = vunpack.c.l.b16 %v566
        %v666 = vunpack.c.l.b16 %v567
        %v667 = vunpack.c.l.b16 %v568
        %v668 = vunpack.c.l.b16 %v569
        %v669 = vunpack.c.l.b16 %v570
        %v670 = vunpack.c.l.b16 %v571
        %v671 = vunpack.c.l.b16 %v572
        %v672 = vunpack.c.l.b16 %v573
        %v673 = vunpack.c.l.b16 %v574
        %v674 = vunpack.c.l.b16 %v575
        %v675 = vunpack.c.l.b16 %v576
        %v676 = vunpack.c.l.b16 %v577
        %v677 = vunpack.c.l.b16 %v578
        %v678 = vunpack.c.l.b16 %v579
        %v679 = vunpack.c.l.b16 %v580
        %v680 = vunpack.c.l.b16 %v581
        %v681 = vunpack.c.l.b16 %v582
        %v682 = vunpack.c.l.b16 %v583
        %v683 = vunpack.c.l.b16 %v584
        %v684 = vunpack.c.l.b16 %v585
        %v685 = vunpack.c.l.b16 %v586
        %v686 = vunpack.c.l.b16 %v587
        %v687 = vunpack.c.l.b16 %v588
        %v688 = vunpack.c.l.b16 %v589
        %v689 = vunpack.c.l.b16 %v590
        %v690 = vunpack.c.l.b16 %v591
        %v691 = vunpack.c.l.b16 %v592
        %v692 = vunpack.c.l.b16 %v593
        %v693 = vunpack.c.l.b16 %v594
        %v694 = vunpack.c.l.b16 %v595
        %v695 = vpack.c.b16 %v660, %v659
        %v696 = vpack.c.b16 %v662, %v661
        %v697 = vpack.c.b16 %v664, %v663
        %v698 = vpack.c.b16 %v666, %v665
        %v699 = vpack.c.b16 %v668, %v667
        %v700 = vpack.c.b16 %v670, %v669
        %v701 = vpack.c.b16 %v672, %v671
        %v702 = vpack.c.b16 %v674, %v673
        %v703 = vpack.c.b16 %v676, %v675
        %v704 = vpack.c.b16 %v678, %v677
        %v705 = vpack.c.b16 %v680, %v679
        %v706 = vpack.c.b16 %v682, %v681
        %v707 = vpack.c.b16 %v684, %v683
        %v708 = vpack.c.b16 %v686, %v685
        %v709 = vpack.c.b16 %v688, %v687
        %v710 = vpack.c.b16 %v690, %v689
        %v711 = vpack.c.b16 %v692, %v691
        %v712 = vpack.c.b16 %v694, %v693
        %vm731 = vcmask 261120
        %v733 = vsel %vm731, %v620, 0
        %735 = vmatpush.bf16.msra.mxu0 %v702
        %736 = vmatpush.bf16.msra.mxu0 %v701
        %737 = vmatpush.bf16.msra.mxu0 %v700
        %738 = vmatpush.bf16.msra.mxu0 %v699
        %739 = vmatpush.bf16.msra.mxu0 %v698
        %740 = vmatpush.bf16.msra.mxu0 %v697
        %741 = vmatpush.bf16.msra.mxu0 %v696
        %742 = vmatpush.bf16.msra.mxu0 %v695
        %743 = vmatmul.bf16.gmra.mxu0 %v618
        %v744 = vpop.f32.mrf.mxu0
        %v745 = vadd.f32 %v601, %v744
        %v746 = vpop.f32.mrf.mxu0
        %v747 = vadd.f32 %v606, %v746
        %748 = vdwg.mxu0
        %749 = vmatpush.bf16.msra.mxu0 %v710
        %750 = vmatpush.bf16.msra.mxu0 %v709
        %751 = vmatpush.bf16.msra.mxu0 %v708
        %752 = vmatpush.bf16.msra.mxu0 %v707
        %753 = vmatpush.bf16.msra.mxu0 %v706
        %754 = vmatpush.bf16.msra.mxu0 %v705
        %755 = vmatpush.bf16.msra.mxu0 %v704
        %756 = vmatpush.bf16.msra.mxu0 %v703
        %757 = vmatmul.bf16.gmra.mxu0 %v619
        %v758 = vpop.f32.mrf.mxu0
        %v759 = vadd.f32 %v745, %v758
        %v760 = vpop.f32.mrf.mxu0
        %v761 = vadd.f32 %v747, %v760
        %762 = vdwg.mxu0
        %763 = vmatpush.bf16.msra.mxu0 0
        %764 = vmatpush.bf16.msra.mxu0 0
        %765 = vmatpush.bf16.msra.mxu0 0
        %766 = vmatpush.bf16.msra.mxu0 0
        %767 = vmatpush.bf16.msra.mxu0 0
        %768 = vmatpush.bf16.msra.mxu0 0
        %769 = vmatpush.bf16.msra.mxu0 %v712
        %770 = vmatpush.bf16.msra.mxu0 %v711
        %771 = vmatmul.bf16.gmra.mxu0 %v733
        %v772 = vpop.f32.mrf.mxu0
        %v773 = vadd.f32 %v759, %v772
        %v774 = vpop.f32.mrf.mxu0
        %v775 = vadd.f32 %v761, %v774
        %776 = vdwg.mxu0
        %v777 = vld [vmem:[%s3] sm:$0x1]
        %v779 = vperm.slane %v777, 0
        %v781 = vmul.f32 %v773, %v779
        %v782 = vmul.f32 %v775, %v779
        %783 = vadd.xlane.f32.xlu0 %v781
        %v784 = vpop.xlane.xlu0 %783
        %785 = vadd.xlane.f32.xlu0 %v782
        %v786 = vpop.xlane.xlu0 %785
        %v787 = vmul.f32 %v781, %v781
        %v788 = vmul.f32 %v782, %v782
        %789 = vadd.xlane.f32.xlu0 %v787
        %v790 = vpop.xlane.xlu0 %789
        %791 = vadd.xlane.f32.xlu0 %v788
        %v792 = vpop.xlane.xlu0 %791
        %vm793 = vcmask 7168
        %v794 = vsel %vm793, %v784, %v790
        %v795 = vsel %vm793, %v786, %v792
        %v796 = vld [vmem:[%s6] sm:$0xff]
        %v797 = vld [vmem:[%s6 + $0x8] sm:$0xff]
        %vm798 = vcmask 130048
        %v800 = vsel %vm798, %v796, 0
        %v803 = vsel %vm798, %v797, 0
        %805 = vmatpush.msra.mxu0 0.0
        %806 = vmatpush.msra.mxu0 0.0
        %807 = vmatpush.msra.mxu0 0.0
        %808 = vmatpush.msra.mxu0 0.0
        %809 = vmatpush.msra.mxu0 0.0
        %810 = vmatpush.msra.mxu0 0.0
        %811 = vmatpush.msra.mxu0 0.0
        %812 = vmatpush.msra.mxu0 0.0
        %813 = vmatpush.msra.mxu0 0.0
        %814 = vmatpush.msra.mxu0 0.0
        %815 = vmatpush.msra.mxu0 0.0
        %816 = vmatpush.msra.mxu0 0.0
        %817 = vmatpush.msra.mxu0 0.0
        %818 = vmatpush.msra.mxu0 0.0
        %819 = vmatpush.msra.mxu0 %v795
        %820 = vmatpush.msra.mxu0 %v794
        %821 = vmatmul.f32.gmra.mxu0 %v800
        %v822 = vpop.f32.mrf.mxu0
        %v823 = vadd.f32 0.0, %v822
        %824 = vmatmul.f32.gmra.mxu0 %v803
        %v825 = vpop.f32.mrf.mxu0
        %v826 = vadd.f32 0.0, %v825
        %827 = vdwg.mxu0
        %v828 = vmul.f32 %v823, 0.015625
        %v829 = vmul.f32 %v826, 0.015625
        %v830 = vmul.f32 %v828, %v828
        %v831 = vmul.f32 %v829, %v829
        %834 = vrot.lane.b32.xlu0 %v830, 1
        %v835 = vpop.permute.xlu0 %834
        %836 = vrot.lane.b32.xlu0 %v831, 1
        %v837 = vpop.permute.xlu0 %836
        %v840 = vsub.f32 %v828, %v835
        %v841 = vsub.f32 %v829, %v837
        %843 = vset.pattern.permute.xlu0 0
        %844 = vperm.xlu0 %843, %v828
        %v845 = vpop.permute.xlu0 %844
        %848 = vset.pattern.permute.xlu0 0
        %849 = vperm.xlu0 %848, %v829
        %v850 = vpop.permute.xlu0 %849
        %v852 = vsub.f32 %v773, %v845
        %v853 = vsub.f32 %v775, %v850
        %v854 = vadd.f32 %v840, 1e-05
        %v855 = vadd.f32 %v841, 1e-05
        %v856 = vrsqrt.pop %v854
        %v857 = vmul.f32 %v856, %v854
        %v858 = vmul.f32 %v857, %v856
        %v859 = vmul.f32 0.5, %v858
        %v860 = vsub.f32 1.5, %v859
        %v861 = vmul.f32 %v856, %v860
        %vm862 = vweird.f32 %v854
        %vm863 = vweird.f32 %v856
        %vm864 = vmor %vm862, %vm863
        %v865 = vsel %vm864, %v856, %v861
        %v866 = vrsqrt.pop %v855
        %v867 = vmul.f32 %v866, %v855
        %v868 = vmul.f32 %v867, %v866
        %v869 = vmul.f32 0.5, %v868
        %v870 = vsub.f32 1.5, %v869
        %v871 = vmul.f32 %v866, %v870
        %vm872 = vweird.f32 %v855
        %vm873 = vweird.f32 %v866
        %vm874 = vmor %vm872, %vm873
        %v875 = vsel %vm874, %v866, %v871
        %877 = vset.pattern.permute.xlu0 1
        %878 = vperm.xlu0 %877, %v865
        %v879 = vpop.permute.xlu0 %878
        %882 = vset.pattern.permute.xlu0 1
        %883 = vperm.xlu0 %882, %v875
        %v884 = vpop.permute.xlu0 %883
        %v886 = vmul.f32 %v852, %v879
        %v887 = vmul.f32 %v853, %v884
        %v888 = vld [vmem:[%s4] sm:$0xff]
        %v889 = vld [vmem:[%s4 + $0x8] sm:$0xff]
        %891 = vset.pattern.permute.xlu0 0
        %892 = vperm.xlu0 %891, %v888
        %v893 = vpop.permute.xlu0 %892
        %896 = vset.pattern.permute.xlu0 0
        %897 = vperm.xlu0 %896, %v889
        %v898 = vpop.permute.xlu0 %897
        %v900 = vmul.f32 %v886, %v893
        %v901 = vmul.f32 %v887, %v898
        %v902 = vld [vmem:[%s5] sm:$0xff]
        %v903 = vld [vmem:[%s5 + $0x8] sm:$0xff]
        %905 = vset.pattern.permute.xlu0 0
        %906 = vperm.xlu0 %905, %v902
        %v907 = vpop.permute.xlu0 %906
        %910 = vset.pattern.permute.xlu0 0
        %911 = vperm.xlu0 %910, %v903
        %v912 = vpop.permute.xlu0 %911
        %v914 = vadd.f32 %v900, %v907
        %v915 = vadd.f32 %v901, %v912
        %v916 = vmax.f32 %v914, 0.0
        %v917 = vmax.f32 %v915, 0.0
        %v918 = vpack.c.bf16 %v917, %v916
        %v919 = vld [vmem:[#allocation6] sm:$0xff]
        %v920 = vld [vmem:[#allocation6 + $0x8] sm:$0xff]
        %v921 = vld [vmem:[#allocation6 + $0x10] sm:$0xff]
        %v922 = vld [vmem:[#allocation6 + $0x18] sm:$0xff]
        %v923 = vld [vmem:[#allocation6 + $0x20] sm:$0xff]
        %v924 = vld [vmem:[#allocation6 + $0x28] sm:$0xff]
        %v925 = vld [vmem:[#allocation6 + $0x30] sm:$0xff]
        %v926 = vld [vmem:[#allocation6 + $0x38] sm:$0xff]
        %v927 = vld [vmem:[#allocation6 + $0x40] sm:$0xff]
        %v928 = vld [vmem:[#allocation6 + $0x48] sm:$0xff]
        %v929 = vld [vmem:[#allocation6 + $0x50] sm:$0xff]
        %v930 = vld [vmem:[#allocation6 + $0x58] sm:$0xff]
        %v931 = vld [vmem:[#allocation6 + $0x60] sm:$0xff]
        %v932 = vld [vmem:[#allocation6 + $0x68] sm:$0xff]
        %v933 = vld [vmem:[#allocation6 + $0x70] sm:$0xff]
        %v934 = vld [vmem:[#allocation6 + $0x78] sm:$0xff]
        %v935 = vld [vmem:[#allocation6 + $0x80] sm:$0xff]
        %v936 = vld [vmem:[#allocation6 + $0x88] sm:$0xff]
        %v937 = vld [vmem:[#allocation6 + $0x90] sm:$0xff]
        %v938 = vld [vmem:[#allocation6 + $0x98] sm:$0xff]
        %v939 = vld [vmem:[#allocation6 + $0xa0] sm:$0xff]
        %v940 = vld [vmem:[#allocation6 + $0xa8] sm:$0xff]
        %v941 = vld [vmem:[#allocation6 + $0xb0] sm:$0xff]
        %v942 = vld [vmem:[#allocation6 + $0xb8] sm:$0xff]
        %v943 = vld [vmem:[#allocation6 + $0xc0] sm:$0xff]
        %v944 = vld [vmem:[#allocation6 + $0xc8] sm:$0xff]
        %v945 = vld [vmem:[#allocation6 + $0xd0] sm:$0xff]
        %v946 = vld [vmem:[#allocation6 + $0xd8] sm:$0xff]
        %v947 = vld [vmem:[#allocation6 + $0xe0] sm:$0xff]
        %v948 = vld [vmem:[#allocation6 + $0xe8] sm:$0xff]
        %v949 = vld [vmem:[#allocation6 + $0xf0] sm:$0xff]
        %v950 = vld [vmem:[#allocation6 + $0xf8] sm:$0xff]
        %v983 = vunpack.c.l.b16 %v919
        %v984 = vunpack.c.h.b16 %v919
        %v985 = vunpack.c.l.b16 %v920
        %v986 = vunpack.c.h.b16 %v920
        %v987 = vunpack.c.l.b16 %v921
        %v988 = vunpack.c.h.b16 %v921
        %v989 = vunpack.c.l.b16 %v922
        %v990 = vunpack.c.h.b16 %v922
        %v991 = vunpack.c.l.b16 %v923
        %v992 = vunpack.c.h.b16 %v923
        %v993 = vunpack.c.l.b16 %v924
        %v994 = vunpack.c.h.b16 %v924
        %v995 = vunpack.c.l.b16 %v925
        %v996 = vunpack.c.h.b16 %v925
        %v997 = vunpack.c.l.b16 %v926
        %v998 = vunpack.c.h.b16 %v926
        %v999 = vunpack.c.l.b16 %v927
        %v1000 = vunpack.c.h.b16 %v927
        %v1001 = vunpack.c.l.b16 %v928
        %v1002 = vunpack.c.h.b16 %v928
        %v1003 = vunpack.c.l.b16 %v929
        %v1004 = vunpack.c.h.b16 %v929
        %v1005 = vunpack.c.l.b16 %v930
        %v1006 = vunpack.c.h.b16 %v930
        %v1007 = vunpack.c.l.b16 %v931
        %v1008 = vunpack.c.h.b16 %v931
        %v1009 = vunpack.c.l.b16 %v932
        %v1010 = vunpack.c.h.b16 %v932
        %v1011 = vunpack.c.l.b16 %v933
        %v1012 = vunpack.c.h.b16 %v933
        %v1013 = vunpack.c.l.b16 %v934
        %v1014 = vunpack.c.h.b16 %v934
        %v1015 = vunpack.c.l.b16 %v935
        %v1016 = vunpack.c.h.b16 %v935
        %v1017 = vunpack.c.l.b16 %v936
        %v1018 = vunpack.c.h.b16 %v936
        %v1019 = vunpack.c.l.b16 %v937
        %v1020 = vunpack.c.h.b16 %v937
        %v1021 = vunpack.c.l.b16 %v938
        %v1022 = vunpack.c.h.b16 %v938
        %v1023 = vunpack.c.l.b16 %v939
        %v1024 = vunpack.c.h.b16 %v939
        %v1025 = vunpack.c.l.b16 %v940
        %v1026 = vunpack.c.h.b16 %v940
        %v1027 = vunpack.c.l.b16 %v941
        %v1028 = vunpack.c.h.b16 %v941
        %v1029 = vunpack.c.l.b16 %v942
        %v1030 = vunpack.c.h.b16 %v942
        %v1031 = vunpack.c.l.b16 %v943
        %v1032 = vunpack.c.h.b16 %v943
        %v1033 = vunpack.c.l.b16 %v944
        %v1034 = vunpack.c.h.b16 %v944
        %v1035 = vunpack.c.l.b16 %v945
        %v1036 = vunpack.c.h.b16 %v945
        %v1037 = vunpack.c.l.b16 %v946
        %v1038 = vunpack.c.h.b16 %v946
        %v1039 = vunpack.c.l.b16 %v947
        %v1040 = vunpack.c.h.b16 %v947
        %v1041 = vunpack.c.l.b16 %v948
        %v1042 = vunpack.c.h.b16 %v948
        %v1043 = vunpack.c.l.b16 %v949
        %v1044 = vunpack.c.h.b16 %v949
        %v1045 = vunpack.c.l.b16 %v950
        %v1046 = vunpack.c.h.b16 %v950
        %v1047 = vpack.c.b16 %v987, %v983
        %v1048 = vpack.c.b16 %v988, %v984
        %v1049 = vpack.c.b16 %v989, %v985
        %v1050 = vpack.c.b16 %v990, %v986
        %v1051 = vpack.c.b16 %v995, %v991
        %v1052 = vpack.c.b16 %v996, %v992
        %v1053 = vpack.c.b16 %v997, %v993
        %v1054 = vpack.c.b16 %v998, %v994
        %v1055 = vpack.c.b16 %v1003, %v999
        %v1056 = vpack.c.b16 %v1004, %v1000
        %v1057 = vpack.c.b16 %v1005, %v1001
        %v1058 = vpack.c.b16 %v1006, %v1002
        %v1059 = vpack.c.b16 %v1011, %v1007
        %v1060 = vpack.c.b16 %v1012, %v1008
        %v1061 = vpack.c.b16 %v1013, %v1009
        %v1062 = vpack.c.b16 %v1014, %v1010
        %v1063 = vpack.c.b16 %v1019, %v1015
        %v1064 = vpack.c.b16 %v1020, %v1016
        %v1065 = vpack.c.b16 %v1021, %v1017
        %v1066 = vpack.c.b16 %v1022, %v1018
        %v1067 = vpack.c.b16 %v1027, %v1023
        %v1068 = vpack.c.b16 %v1028, %v1024
        %v1069 = vpack.c.b16 %v1029, %v1025
        %v1070 = vpack.c.b16 %v1030, %v1026
        %v1071 = vpack.c.b16 %v1035, %v1031
        %v1072 = vpack.c.b16 %v1036, %v1032
        %v1073 = vpack.c.b16 %v1037, %v1033
        %v1074 = vpack.c.b16 %v1038, %v1034
        %v1075 = vpack.c.b16 %v1043, %v1039
        %v1076 = vpack.c.b16 %v1044, %v1040
        %v1077 = vpack.c.b16 %v1045, %v1041
        %v1078 = vpack.c.b16 %v1046, %v1042
        %1111 = vmatpush.bf16.msra.mxu0 %v1075
        %1112 = vmatpush.bf16.msra.mxu0 %v1071
        %1113 = vmatpush.bf16.msra.mxu0 %v1067
        %1114 = vmatpush.bf16.msra.mxu0 %v1063
        %1115 = vmatpush.bf16.msra.mxu0 %v1059
        %1116 = vmatpush.bf16.msra.mxu0 %v1055
        %1117 = vmatpush.bf16.msra.mxu0 %v1051
        %1118 = vmatpush.bf16.msra.mxu0 %v1047
        %1119 = vmatmul.bf16.gmra.mxu0 %v918
        %v1120 = vpop.f32.mrf.mxu0
        %v1121 = vadd.f32 0.0, %v1120
        %v1122 = vpop.f32.mrf.mxu0
        %v1123 = vadd.f32 0.0, %v1122
        %1124 = vdwg.mxu0
        %1125 = vmatpush.bf16.msra.mxu0 %v1076
        %1126 = vmatpush.bf16.msra.mxu0 %v1072
        %1127 = vmatpush.bf16.msra.mxu0 %v1068
        %1128 = vmatpush.bf16.msra.mxu0 %v1064
        %1129 = vmatpush.bf16.msra.mxu0 %v1060
        %1130 = vmatpush.bf16.msra.mxu0 %v1056
        %1131 = vmatpush.bf16.msra.mxu0 %v1052
        %1132 = vmatpush.bf16.msra.mxu0 %v1048
        %1133 = vmatmul.bf16.gmra.mxu0 %v918
        %v1134 = vpop.f32.mrf.mxu0
        %v1135 = vadd.f32 0.0, %v1134
        %v1136 = vpop.f32.mrf.mxu0
        %v1137 = vadd.f32 0.0, %v1136
        %1138 = vdwg.mxu0
        %1139 = vmatpush.bf16.msra.mxu0 %v1077
        %1140 = vmatpush.bf16.msra.mxu0 %v1073
        %1141 = vmatpush.bf16.msra.mxu0 %v1069
        %1142 = vmatpush.bf16.msra.mxu0 %v1065
        %1143 = vmatpush.bf16.msra.mxu0 %v1061
        %1144 = vmatpush.bf16.msra.mxu0 %v1057
        %1145 = vmatpush.bf16.msra.mxu0 %v1053
        %1146 = vmatpush.bf16.msra.mxu0 %v1049
        %1147 = vmatmul.bf16.gmra.mxu0 %v918
        %v1148 = vpop.f32.mrf.mxu0
        %v1149 = vadd.f32 0.0, %v1148
        %v1150 = vpop.f32.mrf.mxu0
        %v1151 = vadd.f32 0.0, %v1150
        %1152 = vdwg.mxu0
        %1153 = vmatpush.bf16.msra.mxu0 %v1078
        %1154 = vmatpush.bf16.msra.mxu0 %v1074
        %1155 = vmatpush.bf16.msra.mxu0 %v1070
        %1156 = vmatpush.bf16.msra.mxu0 %v1066
        %1157 = vmatpush.bf16.msra.mxu0 %v1062
        %1158 = vmatpush.bf16.msra.mxu0 %v1058
        %1159 = vmatpush.bf16.msra.mxu0 %v1054
        %1160 = vmatpush.bf16.msra.mxu0 %v1050
        %1161 = vmatmul.bf16.gmra.mxu0 %v918
        %v1162 = vpop.f32.mrf.mxu0
        %v1163 = vadd.f32 0.0, %v1162
        %v1164 = vpop.f32.mrf.mxu0
        %v1165 = vadd.f32 0.0, %v1164
        %1166 = vdwg.mxu0
        %v1167 = vpack.c.bf16 %v1135, %v1121
        %v1168 = vpack.c.bf16 %v1163, %v1149
        %v1169 = vpack.c.bf16 %v1137, %v1123
        %v1170 = vpack.c.bf16 %v1165, %v1151
        %1171 = vst [vmem:[%s342] sm:$0xff] %v1167
        %1172 = vst [vmem:[%s342 + $0x8] sm:$0xff] %v1168
        %1173 = vst [vmem:[%s342 + $0x10] sm:$0xff] %v1169
        %1174 = vst [vmem:[%s342 + $0x18] sm:$0xff] %v1170
        %s1175 = sand.u32 %s207, 1
        %s1176 = scalar_lea.sflag [#allocation5], %s1175
        %s1177 = sand.u32 %s207, 1
        %s1178 = smul.addr %s1177, 32
        %s1179 = scalar_lea.vmem [#allocation8], %s1178
        // Predicated region
        $region61: #{tpu_custom_call.1} parent=51 // pred_check
          %p1180 = pneg %p217
        $region62: #{tpu_custom_call.1} parent=51 // pred_check_branch
          %1182 = sbr.rel (%p1180) target = $region64
        $region63: #{tpu_custom_call.1} parent=51 // pred_region
          %1184 = vsyncadd %s1176, 0
          %s1185 = smul.addr %s26, 8
          %s1186 = smul.addr %s1185, 4
          %s1187 = scalar_lea.hbm %s8, %s1186
          %s1188 = sshll.u32 %s1179, 4
          %s1189 = int_to_ptr.vmem [resolvable:$true] %s1188
          %s1190 = sshll.u32 %s1187, 4
          %s1191 = int_to_ptr.hbm [resolvable:$true] %s1190
          %1196 = dma.vmem_to_hbm [thread:$0]  %s1189, 512, %s1191, %s1176, 256, 256, 16
        $region64: #{tpu_custom_call.1} parent=51 // pred_fallthru
          _
      $region52: #{tpu_custom_call.1} parent=5 // pred_fallthru
        _
      %p1197 = scmp.le.s32.totalorder 2, %s21
      // Predicated region
      $region65: #{tpu_custom_call.1} parent=5 // pred_check
        %p1198 = pneg %p1197
      $region66: #{tpu_custom_call.1} parent=5 // pred_check_branch
        %1200 = sbr.rel (%p1198) target = $region68
      $region67: #{tpu_custom_call.1} parent=5 // pred_region
        %s1201 = ssub.s32 %s21, 2
        // Predicated region
        $region69: #{tpu_custom_call.1} parent=67 // pred_check
          %p1202 = pneg %p223
        $region70: #{tpu_custom_call.1} parent=67 // pred_check_branch
          %1204 = sbr.rel (%p1202) target = $region72
        $region71: #{tpu_custom_call.1} parent=67 // pred_region
          %s1205 = sand.u32 %s208, 1
          %s1206 = scalar_lea.sflag [#allocation5], %s1205
          %s1207 = sand.u32 %s208, 1
          %s1208 = smul.addr %s1207, 32
          %s1209 = scalar_lea.vmem [#allocation8], %s1208
          %1211 = dma.done %s1206, 512
        $region72: #{tpu_custom_call.1} parent=67 // pred_fallthru
          _
      $region68: #{tpu_custom_call.1} parent=5 // pred_fallthru
        _
    $region6: #{tpu_custom_call.1} parent=1 // loop_footer
      %s25 = sadd.s32 1, %s21
    $region7: #{tpu_custom_call.1} parent=1 // loop_footer_branch
      %20 = sbr.rel target = $region3
    $region8: #{tpu_custom_call.1} parent=1 // loop_exit
      _
    %1212 = vsyncpa [#allocation4], 1
    %s1213 = scalar_lea.sflag [#allocation4], 1
    %1214 = vsyncpa %s1213, 1
    %1215 = vsyncpa [#allocation7], 1
    %1216 = vsyncpa [#allocation5], 1
    %s1217 = scalar_lea.sflag [#allocation5], 1
    %1218 = vsyncpa %s1217, 1

</llo_original>
